<compile_context>
chip_gen: v5e
topology: v5e:2x2
jax: 0.10.0
libtpu: 0.0.40
codegen_flags: <defaults>
</compile_context>

<pallas_src>
import jax
import jax.numpy as jnp
from jax.experimental import pallas as pl
from jax.experimental.pallas import tpu as pltpu

LANE = 128


def _round_up(x, m):
    return -(-x // m) * m


# -----------------------------------------------------------------------------
# Fused 3x3 conv (+ folded BN/bias + optional residual + optional ReLU) kernel
# -----------------------------------------------------------------------------
def _conv_kernel_body(x_ref, w_ref, sc_ref, sh_ref, r_ref, o_ref, *,
                      row_stride, relu):
    """x_ref: (1, L, C) bf16 spatially-padded NHWC image flattened over (rows, W+2)
       w_ref: (3, 3, C, OCp) bf16; sc/sh: (1, OCp) f32
       r_ref: (1, M, OCp) residual or None; o_ref: (1, M, OCp)."""
    m = o_ref.shape[1]
    acc = None
    for kh in range(3):
        for kw in range(3):
            off = kh * row_stride + kw          # static contiguous tap slice
            patch = x_ref[0, off:off + m, :]    # (M, C) bf16
            part = jnp.dot(patch, w_ref[kh, kw],
                           preferred_element_type=jnp.float32)
            acc = part if acc is None else acc + part
    y = acc * sc_ref[...] + sh_ref[...]         # fused BN + conv bias (f32)
    if r_ref is not None:
        y = y + r_ref[0].astype(jnp.float32)    # fused residual add
    if relu:
        y = jnp.maximum(y, 0.0)
    o_ref[0] = y.astype(o_ref.dtype)


def _make_conv_kernel(row_stride, relu, has_residual):
    if has_residual:
        def kernel(x_ref, w_ref, sc_ref, sh_ref, r_ref, o_ref):
            _conv_kernel_body(x_ref, w_ref, sc_ref, sh_ref, r_ref, o_ref,
                              row_stride=row_stride, relu=relu)
    else:
        def kernel(x_ref, w_ref, sc_ref, sh_ref, o_ref):
            _conv_kernel_body(x_ref, w_ref, sc_ref, sh_ref, None, o_ref,
                              row_stride=row_stride, relu=relu)
    return kernel


def fused_conv3x3(x_flat, w4, scale, shift, *, row_stride, out_rows,
                  residual=None, relu=False, out_dtype=jnp.bfloat16):
    """One 3x3 / stride-1 / pad-1 conv with fused BN+bias (+residual, +ReLU).

    Output rows are indexed m = h*(W+2) + w; columns w >= W of each row are
    don't-care values that the caller slices off (they never feed valid math)."""
    N, L, C = x_flat.shape
    _, _, Cw, OCp = w4.shape
    assert Cw == C and OCp % LANE == 0

    in_specs = [
        pl.BlockSpec((1, L, C), lambda n: (n, 0, 0)),
        pl.BlockSpec((3, 3, C, OCp), lambda n: (0, 0, 0, 0)),
        pl.BlockSpec((1, OCp), lambda n: (0, 0)),
        pl.BlockSpec((1, OCp), lambda n: (0, 0)),
    ]
    args = [x_flat, w4, scale, shift]
    if residual is not None:
        in_specs.append(pl.BlockSpec((1, out_rows, OCp), lambda n: (n, 0, 0)))
        args.append(residual)

    out_bytes = N * out_rows * OCp * jnp.dtype(out_dtype).itemsize
    bytes_accessed = (x_flat.size * x_flat.dtype.itemsize
                      + w4.size * w4.dtype.itemsize + out_bytes
                      + (residual.size * residual.dtype.itemsize
                         if residual is not None else 0))
    cost = pl.CostEstimate(flops=2 * N * out_rows * C * OCp * 9,
                           transcendentals=0,
                           bytes_accessed=int(bytes_accessed))

    return pl.pallas_call(
        _make_conv_kernel(row_stride, relu, residual is not None),
        out_shape=jax.ShapeDtypeStruct((N, out_rows, OCp), out_dtype),
        grid_spec=pltpu.PrefetchScalarGridSpec(
            num_scalar_prefetch=0,
            grid=(N,),
            in_specs=in_specs,
            out_specs=pl.BlockSpec((1, out_rows, OCp), lambda n: (n, 0, 0)),
        ),
        compiler_params=pltpu.CompilerParams(
            dimension_semantics=("parallel",),   # 2x TC on v7x, no-op on v5e/v6e
            vmem_limit_bytes=48 * 1024 * 1024,
        ),
        cost_estimate=cost,
    )(*args)


# -----------------------------------------------------------------------------
# Layout / parameter-folding helpers (cheap XLA glue; no full-array im2col)
# -----------------------------------------------------------------------------
def _flatten_padded(x_nhwc):
    """(N,H,W,C) -> (N,(H+3)*(W+2),C): pad H by (1,2), W by (1,1), flatten.
    The extra bottom rows keep all 9 shifted tap slices in bounds."""
    N, H, W, C = x_nhwc.shape
    xp = jnp.pad(x_nhwc, ((0, 0), (1, 2), (1, 1), (0, 0)))
    return xp.reshape(N, (H + 3) * (W + 2), C)


def _unflatten(y_flat, H, W):
    """(N, H*(W+2), OCp) -> (N, H, W, OCp): drop the 2 don't-care cols per row."""
    N, _, OCp = y_flat.shape
    return y_flat.reshape(N, H, W + 2, OCp)[:, :, :W, :]


def _upsample_nearest(x_nhwc, s):
    # TODO(synk): fuse the nearest upsample into the conv kernel (phase-decomposed
    # weights / manual DMA) instead of materializing the s^2-larger activation.
    return jnp.repeat(jnp.repeat(x_nhwc, s, axis=1), s, axis=2)


def _fold_bn(conv_w, conv_b, bn, eps, c_in_pad, oc_pad):
    """Fold inference BatchNorm (+conv bias) into per-channel scale/shift, and
    repack the conv weight as (3,3,C_pad,OC_pad) bf16 with zero padding."""
    gamma, beta, mean, var = bn
    OC, C, _, _ = conv_w.shape
    inv = gamma / jnp.sqrt(var + eps)
    shift = beta - mean * inv
    if conv_b is not None:
        shift = shift + conv_b * inv
    w4 = jnp.transpose(conv_w, (2, 3, 1, 0))                 # (3,3,C,OC)
    w4 = jnp.pad(w4, ((0, 0), (0, 0), (0, c_in_pad - C), (0, oc_pad - OC)))
    scale = jnp.pad(inv, (0, oc_pad - OC)).reshape(1, oc_pad).astype(jnp.float32)
    shift = jnp.pad(shift, (0, oc_pad - OC)).reshape(1, oc_pad).astype(jnp.float32)
    return w4.astype(jnp.bfloat16), scale, shift


# -----------------------------------------------------------------------------
# BasicBlockDec forward (inference-mode BatchNorm), NCHW f32 in / NCHW f32 out
# -----------------------------------------------------------------------------
def basic_block_dec(x, params, *, stride, eps=1e-5):
    N, Cin, H, W = x.shape
    planes = Cin // stride
    ocp_a = _round_up(Cin, LANE)       # padded channels of the conv2 output
    ocp_b = _round_up(planes, LANE)    # padded channels of the block output

    x_nhwc = jnp.transpose(x, (0, 2, 3, 1))

    # --- conv2 -> bn2 -> relu (one fused kernel) ------------------------------
    w2, sc2, sh2 = _fold_bn(params["conv2_w"], None, params["bn2"], eps,
                            c_in_pad=Cin, oc_pad=ocp_a)
    y2_flat = fused_conv3x3(
        _flatten_padded(x_nhwc.astype(jnp.bfloat16)), w2, sc2, sh2,
        row_stride=W + 2, out_rows=H * (W + 2), relu=True,
        out_dtype=jnp.bfloat16)
    y2 = _unflatten(y2_flat, H, W)                            # (N,H,W,ocp_a) bf16

    if stride == 1:
        # --- conv1 -> bn1, + identity shortcut, relu (one fused kernel) -------
        w1, sc1, sh1 = _fold_bn(params["conv1_w"], None, params["bn1"], eps,
                                c_in_pad=ocp_a, oc_pad=ocp_b)
        res = jnp.pad(x_nhwc, ((0, 0), (0, 0), (0, 2), (0, ocp_b - Cin)))
        res = res.reshape(N, H * (W + 2), ocp_b).astype(jnp.float32)
        out_flat = fused_conv3x3(
            _flatten_padded(y2), w1, sc1, sh1,
            row_stride=W + 2, out_rows=H * (W + 2),
            residual=res, relu=True, out_dtype=jnp.float32)
        out = _unflatten(out_flat, H, W)[..., :planes]
    else:
        s = stride
        Ho, Wo = H * s, W * s
        # --- shortcut: ResizeConv2d -> bn (one fused kernel) ------------------
        ws, scs, shs = _fold_bn(params["short_conv_w"], params["short_conv_b"],
                                params["bn_s"], eps, c_in_pad=Cin, oc_pad=ocp_b)
        res = fused_conv3x3(
            _flatten_padded(_upsample_nearest(x_nhwc.astype(jnp.bfloat16), s)),
            ws, scs, shs, row_stride=Wo + 2, out_rows=Ho * (Wo + 2),
            relu=False, out_dtype=jnp.float32)
        # --- conv1 (ResizeConv2d) -> bn1, + shortcut, relu (one fused kernel) -
        w1, sc1, sh1 = _fold_bn(params["conv1_w"], params["conv1_b"],
                                params["bn1"], eps, c_in_pad=ocp_a, oc_pad=ocp_b)
        out_flat = fused_conv3x3(
            _flatten_padded(_upsample_nearest(y2, s)), w1, sc1, sh1,
            row_stride=Wo + 2, out_rows=Ho * (Wo + 2),
            residual=res, relu=True, out_dtype=jnp.float32)
        out = _unflatten(out_flat, Ho, Wo)[..., :planes]

    return jnp.transpose(out, (0, 3, 1, 2))                   # NCHW f32


# -----------------------------------------------------------------------------
# Pure-JAX reference (same numerics: bf16 matmul operands, f32 accumulation)
# -----------------------------------------------------------------------------
def _ref_bn(x, bn, eps):
    gamma, beta, mean, var = bn
    inv = gamma / jnp.sqrt(var + eps)
    return x * inv[None, :, None, None] + (beta - mean * inv)[None, :, None, None]


def _ref_conv3x3(x, w, b=None):
    y = jax.lax.conv_general_dilated(
        x.astype(jnp.bfloat16), w.astype(jnp.bfloat16),
        window_strides=(1, 1), padding=((1, 1), (1, 1)),
        dimension_numbers=("NCHW", "OIHW", "NCHW"),
        preferred_element_type=jnp.float32)
    if b is not None:
        y = y + b[None, :, None, None]
    return y


def basic_block_dec_reference(x, params, *, stride, eps=1e-5):
    out = jax.nn.relu(_ref_bn(_ref_conv3x3(x, params["conv2_w"]),
                              params["bn2"], eps))
    out = out.astype(jnp.bfloat16).astype(jnp.float32)   # bf16 intermediate
    if stride == 1:
        main = _ref_bn(_ref_conv3x3(out, params["conv1_w"]), params["bn1"], eps)
        short = x
    else:
        up = lambda t: jnp.repeat(jnp.repeat(t, stride, axis=2), stride, axis=3)
        main = _ref_bn(_ref_conv3x3(up(out), params["conv1_w"],
                                    params["conv1_b"]), params["bn1"], eps)
        short = _ref_bn(_ref_conv3x3(up(x), params["short_conv_w"],
                                     params["short_conv_b"]), params["bn_s"], eps)
    return jax.nn.relu(main + short)


# -----------------------------------------------------------------------------
def _conv_init(key, oc, ic, k=3):
    kw, kb = jax.random.split(key)
    bound = 1.0 / float(ic * k * k) ** 0.5
    w = jax.random.uniform(kw, (oc, ic, k, k), minval=-bound, maxval=bound,
                           dtype=jnp.float32)
    b = jax.random.uniform(kb, (oc,), minval=-bound, maxval=bound,
                           dtype=jnp.float32)
    return w, b


def _bn_init(key, c):
    k1, k2, k3, k4 = jax.random.split(key, 4)
    gamma = jax.random.uniform(k1, (c,), minval=0.5, maxval=1.5, dtype=jnp.float32)
    beta = 0.2 * jax.random.normal(k2, (c,), dtype=jnp.float32)
    mean = 0.2 * jax.random.normal(k3, (c,), dtype=jnp.float32)
    var = jax.random.uniform(k4, (c,), minval=0.5, maxval=1.5, dtype=jnp.float32)
    return (gamma, beta, mean, var)


if __name__ == "__main__":
    N, IN_PLANES, H, W = 2, 4, 16, 16
    key = jax.random.PRNGKey(0)
    kx, k1, k2, k3, k4, k5, k6 = jax.random.split(key, 7)
    x = jax.random.normal(kx, (N, IN_PLANES, H, W), dtype=jnp.float32)

    for stride in (2, 1):   # stride=2 exercises ResizeConv2d path, stride=1 identity shortcut
        planes = IN_PLANES // stride
        w2, _ = _conv_init(k1, IN_PLANES, IN_PLANES)     # conv2 (bias=False)
        w1, b1 = _conv_init(k2, planes, IN_PLANES)       # conv1
        ws, bs = _conv_init(k3, planes, IN_PLANES)       # shortcut conv
        params = {
            "conv2_w": w2, "bn2": _bn_init(k4, IN_PLANES),
            "conv1_w": w1, "conv1_b": b1, "bn1": _bn_init(k5, planes),
            "short_conv_w": ws, "short_conv_b": bs, "bn_s": _bn_init(k6, planes),
        }
        out = jax.block_until_ready(basic_block_dec(x, params, stride=stride))
        ref = jax.block_until_ready(
            basic_block_dec_reference(x, params, stride=stride))
        assert out.shape == (N, planes, H * stride, W * stride), out.shape
        err = float(jnp.max(jnp.abs(out - ref)))
        assert jnp.allclose(out, ref, atol=1e-2, rtol=1e-2), (stride, err)

    print("KERNEL_OK")
</pallas_src>

<mosaic_0001>
module attributes {stable_mosaic.version = 11 : i64} {
  func.func @kernel(%arg0: i32, %arg1: memref<1x342x4xbf16, #tpu.memory_space<vmem>>, %arg2: memref<3x3x4x128xbf16, #tpu.memory_space<vmem>>, %arg3: memref<1x128xf32, #tpu.memory_space<vmem>>, %arg4: memref<1x128xf32, #tpu.memory_space<vmem>>, %arg5: memref<1x288x128xbf16, #tpu.memory_space<vmem>>) attributes {dimension_semantics = [#tpu.dimension_semantics<parallel>], iteration_bounds = array<i64: 2>, scalar_prefetch = 0 : i64, scratch_operands = 0 : i64, tpu.core_type = #tpu.core_type<tc>, window_params = [{transform_indices = @transform_0, window_bounds = array<i64: 1, 342, 4>}, {pipeline_mode = #tpu.pipeline_mode<synchronous>, transform_indices = @transform_1, window_bounds = array<i64: 3, 3, 4, 128>}, {pipeline_mode = #tpu.pipeline_mode<synchronous>, transform_indices = @transform_2, window_bounds = array<i64: 1, 128>}, {pipeline_mode = #tpu.pipeline_mode<synchronous>, transform_indices = @transform_3, window_bounds = array<i64: 1, 128>}, {transform_indices = @transform_4, window_bounds = array<i64: 1, 288, 128>}]} {
    %c0 = arith.constant 0 : index
    %c0_0 = arith.constant 0 : index
    %c0_1 = arith.constant 0 : index
    %0 = vector.load %arg1[%c0, %c0_0, %c0_1] : memref<1x342x4xbf16, #tpu.memory_space<vmem>>, vector<1x288x4xbf16>
    %1 = vector.shape_cast %0 : vector<1x288x4xbf16> to vector<288x4xbf16>
    %c0_2 = arith.constant 0 : index
    %c0_3 = arith.constant 0 : index
    %c0_4 = arith.constant 0 : index
    %c0_5 = arith.constant 0 : index
    %2 = vector.load %arg2[%c0_2, %c0_3, %c0_4, %c0_5] : memref<3x3x4x128xbf16, #tpu.memory_space<vmem>>, vector<1x1x4x128xbf16>
    %3 = vector.shape_cast %2 : vector<1x1x4x128xbf16> to vector<4x128xbf16>
    %cst = arith.constant dense<0.000000e+00> : vector<288x128xf32>
    %4 = tpu.matmul %1, %3, %cst {dimension_numbers = #tpu.dot_dimension_numbers<[1], [0], [0], [1], [0, 0, 1, 1], [], []>} : vector<288x4xbf16>, vector<4x128xbf16>, vector<288x128xf32> -> vector<288x128xf32>
    %c0_6 = arith.constant 0 : index
    %c1 = arith.constant 1 : index
    %c0_7 = arith.constant 0 : index
    %5 = vector.load %arg1[%c0_6, %c1, %c0_7] : memref<1x342x4xbf16, #tpu.memory_space<vmem>>, vector<1x288x4xbf16>
    %6 = vector.shape_cast %5 : vector<1x288x4xbf16> to vector<288x4xbf16>
    %c0_8 = arith.constant 0 : index
    %c1_9 = arith.constant 1 : index
    %c0_10 = arith.constant 0 : index
    %c0_11 = arith.constant 0 : index
    %7 = vector.load %arg2[%c0_8, %c1_9, %c0_10, %c0_11] : memref<3x3x4x128xbf16, #tpu.memory_space<vmem>>, vector<1x1x4x128xbf16>
    %8 = vector.shape_cast %7 : vector<1x1x4x128xbf16> to vector<4x128xbf16>
    %cst_12 = arith.constant dense<0.000000e+00> : vector<288x128xf32>
    %9 = tpu.matmul %6, %8, %cst_12 {dimension_numbers = #tpu.dot_dimension_numbers<[1], [0], [0], [1], [0, 0, 1, 1], [], []>} : vector<288x4xbf16>, vector<4x128xbf16>, vector<288x128xf32> -> vector<288x128xf32>
    %10 = arith.addf %4, %9 : vector<288x128xf32>
    %c0_13 = arith.constant 0 : index
    %c2 = arith.constant 2 : index
    %c0_14 = arith.constant 0 : index
    %11 = vector.load %arg1[%c0_13, %c2, %c0_14] : memref<1x342x4xbf16, #tpu.memory_space<vmem>>, vector<1x288x4xbf16>
    %12 = vector.shape_cast %11 : vector<1x288x4xbf16> to vector<288x4xbf16>
    %c0_15 = arith.constant 0 : index
    %c2_16 = arith.constant 2 : index
    %c0_17 = arith.constant 0 : index
    %c0_18 = arith.constant 0 : index
    %13 = vector.load %arg2[%c0_15, %c2_16, %c0_17, %c0_18] : memref<3x3x4x128xbf16, #tpu.memory_space<vmem>>, vector<1x1x4x128xbf16>
    %14 = vector.shape_cast %13 : vector<1x1x4x128xbf16> to vector<4x128xbf16>
    %cst_19 = arith.constant dense<0.000000e+00> : vector<288x128xf32>
    %15 = tpu.matmul %12, %14, %cst_19 {dimension_numbers = #tpu.dot_dimension_numbers<[1], [0], [0], [1], [0, 0, 1, 1], [], []>} : vector<288x4xbf16>, vector<4x128xbf16>, vector<288x128xf32> -> vector<288x128xf32>
    %16 = arith.addf %10, %15 : vector<288x128xf32>
    %c0_20 = arith.constant 0 : index
    %c18 = arith.constant 18 : index
    %c0_21 = arith.constant 0 : index
    %17 = vector.load %arg1[%c0_20, %c18, %c0_21] : memref<1x342x4xbf16, #tpu.memory_space<vmem>>, vector<1x288x4xbf16>
    %18 = vector.shape_cast %17 : vector<1x288x4xbf16> to vector<288x4xbf16>
    %c1_22 = arith.constant 1 : index
    %c0_23 = arith.constant 0 : index
    %c0_24 = arith.constant 0 : index
    %c0_25 = arith.constant 0 : index
    %19 = vector.load %arg2[%c1_22, %c0_23, %c0_24, %c0_25] : memref<3x3x4x128xbf16, #tpu.memory_space<vmem>>, vector<1x1x4x128xbf16>
    %20 = vector.shape_cast %19 : vector<1x1x4x128xbf16> to vector<4x128xbf16>
    %cst_26 = arith.constant dense<0.000000e+00> : vector<288x128xf32>
    %21 = tpu.matmul %18, %20, %cst_26 {dimension_numbers = #tpu.dot_dimension_numbers<[1], [0], [0], [1], [0, 0, 1, 1], [], []>} : vector<288x4xbf16>, vector<4x128xbf16>, vector<288x128xf32> -> vector<288x128xf32>
    %22 = arith.addf %16, %21 : vector<288x128xf32>
    %c0_27 = arith.constant 0 : index
    %c19 = arith.constant 19 : index
    %c0_28 = arith.constant 0 : index
    %23 = vector.load %arg1[%c0_27, %c19, %c0_28] : memref<1x342x4xbf16, #tpu.memory_space<vmem>>, vector<1x288x4xbf16>
    %24 = vector.shape_cast %23 : vector<1x288x4xbf16> to vector<288x4xbf16>
    %c1_29 = arith.constant 1 : index
    %c1_30 = arith.constant 1 : index
    %c0_31 = arith.constant 0 : index
    %c0_32 = arith.constant 0 : index
    %25 = vector.load %arg2[%c1_29, %c1_30, %c0_31, %c0_32] : memref<3x3x4x128xbf16, #tpu.memory_space<vmem>>, vector<1x1x4x128xbf16>
    %26 = vector.shape_cast %25 : vector<1x1x4x128xbf16> to vector<4x128xbf16>
    %cst_33 = arith.constant dense<0.000000e+00> : vector<288x128xf32>
    %27 = tpu.matmul %24, %26, %cst_33 {dimension_numbers = #tpu.dot_dimension_numbers<[1], [0], [0], [1], [0, 0, 1, 1], [], []>} : vector<288x4xbf16>, vector<4x128xbf16>, vector<288x128xf32> -> vector<288x128xf32>
    %28 = arith.addf %22, %27 : vector<288x128xf32>
    %c0_34 = arith.constant 0 : index
    %c20 = arith.constant 20 : index
    %c0_35 = arith.constant 0 : index
    %29 = vector.load %arg1[%c0_34, %c20, %c0_35] : memref<1x342x4xbf16, #tpu.memory_space<vmem>>, vector<1x288x4xbf16>
    %30 = vector.shape_cast %29 : vector<1x288x4xbf16> to vector<288x4xbf16>
    %c1_36 = arith.constant 1 : index
    %c2_37 = arith.constant 2 : index
    %c0_38 = arith.constant 0 : index
    %c0_39 = arith.constant 0 : index
    %31 = vector.load %arg2[%c1_36, %c2_37, %c0_38, %c0_39] : memref<3x3x4x128xbf16, #tpu.memory_space<vmem>>, vector<1x1x4x128xbf16>
    %32 = vector.shape_cast %31 : vector<1x1x4x128xbf16> to vector<4x128xbf16>
    %cst_40 = arith.constant dense<0.000000e+00> : vector<288x128xf32>
    %33 = tpu.matmul %30, %32, %cst_40 {dimension_numbers = #tpu.dot_dimension_numbers<[1], [0], [0], [1], [0, 0, 1, 1], [], []>} : vector<288x4xbf16>, vector<4x128xbf16>, vector<288x128xf32> -> vector<288x128xf32>
    %34 = arith.addf %28, %33 : vector<288x128xf32>
    %c0_41 = arith.constant 0 : index
    %c36 = arith.constant 36 : index
    %c0_42 = arith.constant 0 : index
    %35 = vector.load %arg1[%c0_41, %c36, %c0_42] : memref<1x342x4xbf16, #tpu.memory_space<vmem>>, vector<1x288x4xbf16>
    %36 = vector.shape_cast %35 : vector<1x288x4xbf16> to vector<288x4xbf16>
    %c2_43 = arith.constant 2 : index
    %c0_44 = arith.constant 0 : index
    %c0_45 = arith.constant 0 : index
    %c0_46 = arith.constant 0 : index
    %37 = vector.load %arg2[%c2_43, %c0_44, %c0_45, %c0_46] : memref<3x3x4x128xbf16, #tpu.memory_space<vmem>>, vector<1x1x4x128xbf16>
    %38 = vector.shape_cast %37 : vector<1x1x4x128xbf16> to vector<4x128xbf16>
    %cst_47 = arith.constant dense<0.000000e+00> : vector<288x128xf32>
    %39 = tpu.matmul %36, %38, %cst_47 {dimension_numbers = #tpu.dot_dimension_numbers<[1], [0], [0], [1], [0, 0, 1, 1], [], []>} : vector<288x4xbf16>, vector<4x128xbf16>, vector<288x128xf32> -> vector<288x128xf32>
    %40 = arith.addf %34, %39 : vector<288x128xf32>
    %c0_48 = arith.constant 0 : index
    %c37 = arith.constant 37 : index
    %c0_49 = arith.constant 0 : index
    %41 = vector.load %arg1[%c0_48, %c37, %c0_49] : memref<1x342x4xbf16, #tpu.memory_space<vmem>>, vector<1x288x4xbf16>
    %42 = vector.shape_cast %41 : vector<1x288x4xbf16> to vector<288x4xbf16>
    %c2_50 = arith.constant 2 : index
    %c1_51 = arith.constant 1 : index
    %c0_52 = arith.constant 0 : index
    %c0_53 = arith.constant 0 : index
    %43 = vector.load %arg2[%c2_50, %c1_51, %c0_52, %c0_53] : memref<3x3x4x128xbf16, #tpu.memory_space<vmem>>, vector<1x1x4x128xbf16>
    %44 = vector.shape_cast %43 : vector<1x1x4x128xbf16> to vector<4x128xbf16>
    %cst_54 = arith.constant dense<0.000000e+00> : vector<288x128xf32>
    %45 = tpu.matmul %42, %44, %cst_54 {dimension_numbers = #tpu.dot_dimension_numbers<[1], [0], [0], [1], [0, 0, 1, 1], [], []>} : vector<288x4xbf16>, vector<4x128xbf16>, vector<288x128xf32> -> vector<288x128xf32>
    %46 = arith.addf %40, %45 : vector<288x128xf32>
    %c0_55 = arith.constant 0 : index
    %c38 = arith.constant 38 : index
    %c0_56 = arith.constant 0 : index
    %47 = vector.load %arg1[%c0_55, %c38, %c0_56] : memref<1x342x4xbf16, #tpu.memory_space<vmem>>, vector<1x288x4xbf16>
    %48 = vector.shape_cast %47 : vector<1x288x4xbf16> to vector<288x4xbf16>
    %c2_57 = arith.constant 2 : index
    %c2_58 = arith.constant 2 : index
    %c0_59 = arith.constant 0 : index
    %c0_60 = arith.constant 0 : index
    %49 = vector.load %arg2[%c2_57, %c2_58, %c0_59, %c0_60] : memref<3x3x4x128xbf16, #tpu.memory_space<vmem>>, vector<1x1x4x128xbf16>
    %50 = vector.shape_cast %49 : vector<1x1x4x128xbf16> to vector<4x128xbf16>
    %cst_61 = arith.constant dense<0.000000e+00> : vector<288x128xf32>
    %51 = tpu.matmul %48, %50, %cst_61 {dimension_numbers = #tpu.dot_dimension_numbers<[1], [0], [0], [1], [0, 0, 1, 1], [], []>} : vector<288x4xbf16>, vector<4x128xbf16>, vector<288x128xf32> -> vector<288x128xf32>
    %52 = arith.addf %46, %51 : vector<288x128xf32>
    %c0_62 = arith.constant 0 : index
    %c0_63 = arith.constant 0 : index
    %53 = vector.load %arg3[%c0_62, %c0_63] : memref<1x128xf32, #tpu.memory_space<vmem>>, vector<1x128xf32>
    %54 = vector.broadcast %53 : vector<1x128xf32> to vector<288x128xf32>
    %55 = arith.mulf %52, %54 : vector<288x128xf32>
    %c0_64 = arith.constant 0 : index
    %c0_65 = arith.constant 0 : index
    %56 = vector.load %arg4[%c0_64, %c0_65] : memref<1x128xf32, #tpu.memory_space<vmem>>, vector<1x128xf32>
    %57 = vector.broadcast %56 : vector<1x128xf32> to vector<288x128xf32>
    %58 = arith.addf %55, %57 : vector<288x128xf32>
    %cst_66 = arith.constant 0.000000e+00 : f32
    %59 = vector.broadcast %cst_66 : f32 to vector<288x128xf32>
    %60 = arith.maximumf %58, %59 : vector<288x128xf32>
    %61 = arith.truncf %60 : vector<288x128xf32> to vector<288x128xbf16>
    %c0_67 = arith.constant 0 : index
    %c0_68 = arith.constant 0 : index
    %c0_69 = arith.constant 0 : index
    %62 = vector.load %arg5[%c0_67, %c0_68, %c0_69] : memref<1x288x128xbf16, #tpu.memory_space<vmem>>, vector<1x288x128xbf16>
    %63 = vector.shape_cast %62 : vector<1x288x128xbf16> to vector<288x128xbf16>
    %64 = vector.shape_cast %61 : vector<288x128xbf16> to vector<1x288x128xbf16>
    tpu.vector_store %arg5[%c0_67, %c0_68, %c0_69], %64 {strides = array<i32>} : memref<1x288x128xbf16, #tpu.memory_space<vmem>>, vector<1x288x128xbf16>,
    return
  }
  func.func @transform_0(%arg0: i32) -> (i32, i32, i32) {
    %c0_i32 = arith.constant 0 : i32
    %c0_i32_0 = arith.constant 0 : i32
    %c0_i32_1 = arith.constant 0 : i32
    return %arg0, %c0_i32, %c0_i32_0 : i32, i32, i32
  }
  func.func @transform_1(%arg0: i32) -> (i32, i32, i32, i32) {
    %c0_i32 = arith.constant 0 : i32
    %c0_i32_0 = arith.constant 0 : i32
    %c0_i32_1 = arith.constant 0 : i32
    %c0_i32_2 = arith.constant 0 : i32
    %c0_i32_3 = arith.constant 0 : i32
    return %c0_i32, %c0_i32_0, %c0_i32_1, %c0_i32_2 : i32, i32, i32, i32
  }
  func.func @transform_2(%arg0: i32) -> (i32, i32) {
    %c0_i32 = arith.constant 0 : i32
    %c0_i32_0 = arith.constant 0 : i32
    %c0_i32_1 = arith.constant 0 : i32
    return %c0_i32, %c0_i32_0 : i32, i32
  }
  func.func @transform_3(%arg0: i32) -> (i32, i32) {
    %c0_i32 = arith.constant 0 : i32
    %c0_i32_0 = arith.constant 0 : i32
    %c0_i32_1 = arith.constant 0 : i32
    return %c0_i32, %c0_i32_0 : i32, i32
  }
  func.func @transform_4(%arg0: i32) -> (i32, i32, i32) {
    %c0_i32 = arith.constant 0 : i32
    %c0_i32_0 = arith.constant 0 : i32
    %c0_i32_1 = arith.constant 0 : i32
    return %arg0, %c0_i32, %c0_i32_0 : i32, i32, i32
  }
}

</mosaic_0001>

<llo_original>
// kernel: tpu_custom_call.1
$region0: #{tpu_custom_call.1}
  #allocation0 [shape = 'u32[]', space=smem, size = 0x4, offset = 0x4, fixed_abs, tag = 'smem constant byte address 0x4 - core index']
  #allocation1 [shape = 'u32[72,128]{1,0:T(1,128)}', space=vmem, size = 0x9000, scoped, tag = 'internal scratch']
  %s0 = inlined_call_operand.vmem [shape: bf16[2,342,4], index: 0, kind: input, shape index: {}]
  %s1 = inlined_call_operand.vmem [shape: bf16[3,3,4,128], index: 1, kind: input, shape index: {}]
  %s2 = inlined_call_operand.vmem [shape: f32[1,128], index: 2, kind: input, shape index: {}]
  %s3 = inlined_call_operand.vmem [shape: f32[1,128], index: 3, kind: input, shape index: {}]
  %s4 = inlined_call_operand.hbm [shape: bf16[2,288,128], index: 4, kind: output, shape index: {}]
  %s5 = sld [smem:[#allocation0]]
  $region49: #{tpu_custom_call.1} parent=0
    _
  %s7 = ssub.s32 1, %s5
  %s8 = scalar_select 0, %s7, %s5
  $region1: #{tpu_custom_call.1} parent=0
    #allocation2 [shape = 'u8[147456]{0}', space=vmem, size = 0x24000, scoped, tag = 'output window, operand 0']
    #allocation3 [shape = 's32[2]{0}', space=sflag, size = 0x8, scoped, tag = 'scoped memory for tpu_custom_call.1']
    %9 = vsyncpa [#allocation3], 0
    %s10 = scalar_lea.sflag [#allocation3], 1
    %11 = vsyncpa %s10, 0
    loop: start=0, step=1, limit=4
    $region2: #{tpu_custom_call.1} parent=1 // loop_pre_header
      _
    $region3: #{tpu_custom_call.1} parent=1 // loop_header
      %s13 = sphi 0, %s17
      %p14 = scmp.ge.s32.totalorder %s13, 4
      %s23 = sphi 0, %s25
      %s26 = sphi 0, %s23
      %s27 = sphi 0, %s26
      %s43 = sphi 0, %s27
      %s47 = sphi 0, %s47
      %s49 = sphi 0, %s47
      %s50 = sphi 0, %s49
      %s64 = sphi 0, %s50
      %s68 = sphi 0, %s68
      %s70 = sphi 0, %s68
      %s71 = sphi 0, %s70
      %s85 = sphi 0, %s71
      %s89 = sphi 0, %s89
      %s91 = sphi 0, %s89
      %s92 = sphi 0, %s91
      %s106 = sphi 0, %s92
      %s112 = sphi 0, %s114
      %s115 = sphi 0, %s112
      %s116 = sphi 0, %s115
      %s132 = sphi 0, %s116
    $region4: #{tpu_custom_call.1} parent=1 // loop_header_branch
      %16 = sbr.rel (%p14) target = $region8
    $region5: #{tpu_custom_call.1} parent=1 // loop_body
      %s18 = ssub.s32 %s13, 1
      %s19 = ssub.s32 %s13, 2
      %s20 = sadd.s32 %s13, 1
      %s21 = ssub.s32 %s13, %s20
      %p22 = scmp.eq.s32.totalorder %s21, 0
      %s24 = sadd.s32 %s23, 1
      %s25 = scalar_select %p22, %s23, %s24
      %p28 = pneg %p22
      %p29 = scmp.eq.s32.totalorder %s13, 1
      %p30 = por %p28, %p29
      %p31 = scmp.ne.s32.totalorder %s23, %s26
      %p32 = scmp.eq.s32.totalorder %s13, 0
      %p33 = por %p31, %p32
      %p34 = scmp.ne.s32.totalorder %s23, %s26
      %p35 = scmp.eq.s32.totalorder %s18, 1
      %p36 = por %p34, %p35
      %p37 = scmp.ne.s32.totalorder %s26, %s27
      %p38 = scmp.eq.s32.totalorder %s18, 0
      %p39 = por %p37, %p38
      %p40 = scmp.ne.s32.totalorder %s26, %s27
      %p41 = scmp.eq.s32.totalorder %s19, 1
      %p42 = por %p40, %p41
      %p44 = scmp.ne.s32.totalorder %s27, %s43
      %p45 = scmp.eq.s32.totalorder %s19, 0
      %p46 = por %p44, %p45
      %s48 = sadd.s32 %s47, 1
      %p51 = scmp.eq.s32.totalorder %s13, 1
      %p52 = scmp.ne.s32.totalorder %s47, %s49
      %p53 = scmp.eq.s32.totalorder %s13, 0
      %p54 = por %p52, %p53
      %p55 = scmp.ne.s32.totalorder %s47, %s49
      %p56 = scmp.eq.s32.totalorder %s18, 1
      %p57 = por %p55, %p56
      %p58 = scmp.ne.s32.totalorder %s49, %s50
      %p59 = scmp.eq.s32.totalorder %s18, 0
      %p60 = por %p58, %p59
      %p61 = scmp.ne.s32.totalorder %s49, %s50
      %p62 = scmp.eq.s32.totalorder %s19, 1
      %p63 = por %p61, %p62
      %p65 = scmp.ne.s32.totalorder %s50, %s64
      %p66 = scmp.eq.s32.totalorder %s19, 0
      %p67 = por %p65, %p66
      %s69 = sadd.s32 %s68, 1
      %p72 = scmp.eq.s32.totalorder %s13, 1
      %p73 = scmp.ne.s32.totalorder %s68, %s70
      %p74 = scmp.eq.s32.totalorder %s13, 0
      %p75 = por %p73, %p74
      %p76 = scmp.ne.s32.totalorder %s68, %s70
      %p77 = scmp.eq.s32.totalorder %s18, 1
      %p78 = por %p76, %p77
      %p79 = scmp.ne.s32.totalorder %s70, %s71
      %p80 = scmp.eq.s32.totalorder %s18, 0
      %p81 = por %p79, %p80
      %p82 = scmp.ne.s32.totalorder %s70, %s71
      %p83 = scmp.eq.s32.totalorder %s19, 1
      %p84 = por %p82, %p83
      %p86 = scmp.ne.s32.totalorder %s71, %s85
      %p87 = scmp.eq.s32.totalorder %s19, 0
      %p88 = por %p86, %p87
      %s90 = sadd.s32 %s89, 1
      %p93 = scmp.eq.s32.totalorder %s13, 1
      %p94 = scmp.ne.s32.totalorder %s89, %s91
      %p95 = scmp.eq.s32.totalorder %s13, 0
      %p96 = por %p94, %p95
      %p97 = scmp.ne.s32.totalorder %s89, %s91
      %p98 = scmp.eq.s32.totalorder %s18, 1
      %p99 = por %p97, %p98
      %p100 = scmp.ne.s32.totalorder %s91, %s92
      %p101 = scmp.eq.s32.totalorder %s18, 0
      %p102 = por %p100, %p101
      %p103 = scmp.ne.s32.totalorder %s91, %s92
      %p104 = scmp.eq.s32.totalorder %s19, 1
      %p105 = por %p103, %p104
      %p107 = scmp.ne.s32.totalorder %s92, %s106
      %p108 = scmp.eq.s32.totalorder %s19, 0
      %p109 = por %p107, %p108
      %s110 = ssub.s32 %s13, %s20
      %p111 = scmp.eq.s32.totalorder %s110, 0
      %s113 = sadd.s32 %s112, 1
      %s114 = scalar_select %p111, %s112, %s113
      %p117 = pneg %p111
      %p118 = scmp.eq.s32.totalorder %s13, 1
      %p119 = por %p117, %p118
      %p120 = scmp.ne.s32.totalorder %s112, %s115
      %p121 = scmp.eq.s32.totalorder %s13, 0
      %p122 = por %p120, %p121
      %p123 = scmp.ne.s32.totalorder %s112, %s115
      %p124 = scmp.eq.s32.totalorder %s18, 1
      %p125 = por %p123, %p124
      %p126 = scmp.ne.s32.totalorder %s115, %s116
      %p127 = scmp.eq.s32.totalorder %s18, 0
      %p128 = por %p126, %p127
      %p129 = scmp.ne.s32.totalorder %s115, %s116
      %p130 = scmp.eq.s32.totalorder %s19, 1
      %p131 = por %p129, %p130
      %p133 = scmp.ne.s32.totalorder %s116, %s132
      %p134 = scmp.eq.s32.totalorder %s19, 0
      %p135 = por %p133, %p134
      %p136 = scmp.le.s32.totalorder 1, %s13
      %p137 = scmp.lt.s32.totalorder %s13, 3
      %p138 = pnand %p136, %p137
      %p139 = pneg %p138
      // Predicated region
      $region9: #{tpu_custom_call.1} parent=5 // pred_check
        _
      $region10: #{tpu_custom_call.1} parent=5 // pred_check_branch
        %141 = sbr.rel (%p138) target = $region12
      $region11: #{tpu_custom_call.1} parent=5 // pred_region
        %s142 = ssub.s32 %s13, 1
        // Predicated region
        $region13: #{tpu_custom_call.1} parent=11 // pred_check
          %p143 = pneg %p60
        $region14: #{tpu_custom_call.1} parent=11 // pred_check_branch
          %145 = sbr.rel (%p143) target = $region16
        $region15: #{tpu_custom_call.1} parent=11 // pred_region
          _
        $region16: #{tpu_custom_call.1} parent=11 // pred_fallthru
          _
        // Predicated region
        $region17: #{tpu_custom_call.1} parent=11 // pred_check
          %p146 = pneg %p81
        $region18: #{tpu_custom_call.1} parent=11 // pred_check_branch
          %148 = sbr.rel (%p146) target = $region20
        $region19: #{tpu_custom_call.1} parent=11 // pred_region
          _
        $region20: #{tpu_custom_call.1} parent=11 // pred_fallthru
          _
        // Predicated region
        $region21: #{tpu_custom_call.1} parent=11 // pred_check
          %p149 = pneg %p102
        $region22: #{tpu_custom_call.1} parent=11 // pred_check_branch
          %151 = sbr.rel (%p149) target = $region24
        $region23: #{tpu_custom_call.1} parent=11 // pred_region
          _
        $region24: #{tpu_custom_call.1} parent=11 // pred_fallthru
          _
      $region12: #{tpu_custom_call.1} parent=5 // pred_fallthru
        _
      %p152 = scmp.lt.s32.totalorder %s13, 2
      // Predicated region
      $region25: #{tpu_custom_call.1} parent=5 // pred_check
        %p153 = pneg %p152
      $region26: #{tpu_custom_call.1} parent=5 // pred_check_branch
        %155 = sbr.rel (%p153) target = $region28
      $region27: #{tpu_custom_call.1} parent=5 // pred_region
        // Predicated region
        $region29: #{tpu_custom_call.1} parent=27 // pred_check
          %p156 = pneg %p33
        $region30: #{tpu_custom_call.1} parent=27 // pred_check_branch
          %158 = sbr.rel (%p156) target = $region32
        $region31: #{tpu_custom_call.1} parent=27 // pred_region
          %p159 = scmp.lt.s32.totalorder %s13, 1
          %s160 = scalar_select %p159, %s13, 1
          %s161 = smul.addr %s160, 43
          %s162 = smul.addr %s161, 4
          %s163 = scalar_lea.vmem %s0, %s162
        $region32: #{tpu_custom_call.1} parent=27 // pred_fallthru
          _
      $region28: #{tpu_custom_call.1} parent=5 // pred_fallthru
        _
      %p164 = scmp.le.s32.totalorder 1, %s13
      %p165 = scmp.lt.s32.totalorder %s13, 3
      %p166 = pnand %p164, %p165
      %p167 = pneg %p166
      // Predicated region
      $region33: #{tpu_custom_call.1} parent=5 // pred_check
        _
      $region34: #{tpu_custom_call.1} parent=5 // pred_check_branch
        %169 = sbr.rel (%p166) target = $region36
      $region35: #{tpu_custom_call.1} parent=5 // pred_region
        %s170 = ssub.s32 %s13, 1
        %p171 = scmp.lt.s32.totalorder %s18, 1
        %s172 = scalar_select %p171, %s18, 1
        %s173 = smul.addr %s172, 43
        %s174 = smul.addr %s173, 4
        %s175 = scalar_lea.vmem %s0, %s174
        %p176 = pneg %p39
        %p177 = pneg %p36
        %p178 = pneg %p60
        %p179 = pneg %p57
        %p180 = pneg %p81
        %p181 = pneg %p78
        %p182 = pneg %p102
        %p183 = pneg %p99
        %p184 = pneg %p128
        %p185 = pneg %p125
        %s186 = sand.u32 %s115, 1
        %s187 = scalar_lea.sflag [#allocation3], %s186
        %s188 = sand.u32 %s115, 1
        %s189 = smul.addr %s188, 144
        %s190 = scalar_lea.vmem [#allocation2], %s189
        %p191 = scmp.lt.s32.totalorder %s18, 1
        %s192 = scalar_select %p191, %s18, 1
        %s193 = smul.addr %s192, 43
        %s194 = smul.addr %s193, 4
        %s195 = scalar_lea.vmem %s0, %s194
        %v197 = vld [vmem:[%s195] sm:$0xf]
        %v198 = vld [vmem:[%s195 + $0x4] sm:$0xf]
        %v199 = vld [vmem:[%s195 + $0x8] sm:$0xf]
        %v200 = vld [vmem:[%s195 + $0xc] sm:$0xf]
        %v201 = vld [vmem:[%s195 + $0x10] sm:$0xf]
        %v202 = vld [vmem:[%s195 + $0x14] sm:$0xf]
        %v203 = vld [vmem:[%s195 + $0x18] sm:$0xf]
        %v204 = vld [vmem:[%s195 + $0x1c] sm:$0xf]
        %v205 = vld [vmem:[%s195 + $0x20] sm:$0xf]
        %v206 = vld [vmem:[%s195 + $0x24] sm:$0xf]
        %v207 = vld [vmem:[%s195 + $0x28] sm:$0xf]
        %v208 = vld [vmem:[%s195 + $0x2c] sm:$0xf]
        %v209 = vld [vmem:[%s195 + $0x30] sm:$0xf]
        %v210 = vld [vmem:[%s195 + $0x34] sm:$0xf]
        %v211 = vld [vmem:[%s195 + $0x38] sm:$0xf]
        %v212 = vld [vmem:[%s195 + $0x3c] sm:$0xf]
        %v213 = vld [vmem:[%s195 + $0x40] sm:$0xf]
        %v214 = vld [vmem:[%s195 + $0x44] sm:$0xf]
        %v215 = vld [vmem:[%s195 + $0x48] sm:$0xf]
        %v216 = vld [vmem:[%s195 + $0x4c] sm:$0xf]
        %v217 = vld [vmem:[%s195 + $0x50] sm:$0xf]
        %v218 = vld [vmem:[%s195 + $0x54] sm:$0xf]
        %v219 = vld [vmem:[%s195 + $0x58] sm:$0xf]
        %v220 = vld [vmem:[%s195 + $0x5c] sm:$0xf]
        %v221 = vld [vmem:[%s195 + $0x60] sm:$0xf]
        %v222 = vld [vmem:[%s195 + $0x64] sm:$0xf]
        %v223 = vld [vmem:[%s195 + $0x68] sm:$0xf]
        %v224 = vld [vmem:[%s195 + $0x6c] sm:$0xf]
        %v225 = vld [vmem:[%s195 + $0x70] sm:$0xf]
        %v226 = vld [vmem:[%s195 + $0x74] sm:$0xf]
        %v227 = vld [vmem:[%s195 + $0x78] sm:$0xf]
        %v228 = vld [vmem:[%s195 + $0x7c] sm:$0xf]
        %v229 = vld [vmem:[%s195 + $0x80] sm:$0xf]
        %v230 = vld [vmem:[%s195 + $0x84] sm:$0xf]
        %v231 = vld [vmem:[%s195 + $0x88] sm:$0xf]
        %v232 = vld [vmem:[%s195 + $0x8c] sm:$0xf]
        %v233 = vld [vmem:[%s1] sm:$0x3]
        %v234 = vld [vmem:[%s195 + $0x90] sm:$0x1]
        %s235 = scalar_lea.vmem %s1, 2
        %v236 = vld [vmem:[%s235] sm:$0x3]
        %v274 = vunpack.c.l.b16 %v197
        %v275 = vunpack.c.l.b16 %v198
        %v276 = vunpack.c.l.b16 %v199
        %v277 = vunpack.c.l.b16 %v200
        %v278 = vunpack.c.l.b16 %v201
        %v279 = vunpack.c.l.b16 %v202
        %v280 = vunpack.c.l.b16 %v203
        %v281 = vunpack.c.l.b16 %v204
        %v282 = vunpack.c.l.b16 %v205
        %v283 = vunpack.c.l.b16 %v206
        %v284 = vunpack.c.l.b16 %v207
        %v285 = vunpack.c.l.b16 %v208
        %v286 = vunpack.c.l.b16 %v209
        %v287 = vunpack.c.l.b16 %v210
        %v288 = vunpack.c.l.b16 %v211
        %v289 = vunpack.c.l.b16 %v212
        %v290 = vunpack.c.l.b16 %v213
        %v291 = vunpack.c.l.b16 %v214
        %v292 = vunpack.c.l.b16 %v215
        %v293 = vunpack.c.l.b16 %v216
        %v294 = vunpack.c.l.b16 %v217
        %v295 = vunpack.c.l.b16 %v218
        %v296 = vunpack.c.l.b16 %v219
        %v297 = vunpack.c.l.b16 %v220
        %v298 = vunpack.c.l.b16 %v221
        %v299 = vunpack.c.l.b16 %v222
        %v300 = vunpack.c.l.b16 %v223
        %v301 = vunpack.c.l.b16 %v224
        %v302 = vunpack.c.l.b16 %v225
        %v303 = vunpack.c.l.b16 %v226
        %v304 = vunpack.c.l.b16 %v227
        %v305 = vunpack.c.l.b16 %v228
        %v306 = vunpack.c.l.b16 %v229
        %v307 = vunpack.c.l.b16 %v230
        %v308 = vunpack.c.l.b16 %v231
        %v309 = vunpack.c.l.b16 %v232
        %v310 = vunpack.c.l.b16 %v234
        %v311 = vpack.c.b16 %v275, %v274
        %v312 = vpack.c.b16 %v277, %v276
        %v313 = vpack.c.b16 %v279, %v278
        %v314 = vpack.c.b16 %v281, %v280
        %v315 = vpack.c.b16 %v283, %v282
        %v316 = vpack.c.b16 %v285, %v284
        %v317 = vpack.c.b16 %v287, %v286
        %v318 = vpack.c.b16 %v289, %v288
        %v319 = vpack.c.b16 %v291, %v290
        %v320 = vpack.c.b16 %v293, %v292
        %v321 = vpack.c.b16 %v295, %v294
        %v322 = vpack.c.b16 %v297, %v296
        %v323 = vpack.c.b16 %v299, %v298
        %v324 = vpack.c.b16 %v301, %v300
        %v325 = vpack.c.b16 %v303, %v302
        %v326 = vpack.c.b16 %v305, %v304
        %v327 = vpack.c.b16 %v307, %v306
        %v328 = vpack.c.b16 %v309, %v308
        %v329 = vpack.c.b16 %v310, %v310
        %vm330 = vsmask.f32 7424
        %v332 = vshrl.u32 %v311, 16
        %v334 = vshll.u32 %v311, 16
        %v336 = vrot.slane %v334, 1
        %v337 = vor.u32 %v332, %v336
        %v339 = vshll.u32 %v312, 16
        %v341 = vrot.slane %v339, 1
        %v342 = vsel %vm330, %v337, %v341
        %v343 = vshrl.u32 %v312, 16
        %v345 = vor.u32 %v343, %v341
        %v347 = vshll.u32 %v313, 16
        %v349 = vrot.slane %v347, 1
        %v350 = vsel %vm330, %v345, %v349
        %v351 = vshrl.u32 %v313, 16
        %v353 = vor.u32 %v351, %v349
        %v355 = vshll.u32 %v314, 16
        %v357 = vrot.slane %v355, 1
        %v358 = vsel %vm330, %v353, %v357
        %v359 = vshrl.u32 %v314, 16
        %v361 = vor.u32 %v359, %v357
        %v363 = vshll.u32 %v315, 16
        %v365 = vrot.slane %v363, 1
        %v366 = vsel %vm330, %v361, %v365
        %v367 = vshrl.u32 %v315, 16
        %v369 = vor.u32 %v367, %v365
        %v371 = vshll.u32 %v316, 16
        %v373 = vrot.slane %v371, 1
        %v374 = vsel %vm330, %v369, %v373
        %v375 = vshrl.u32 %v316, 16
        %v377 = vor.u32 %v375, %v373
        %v379 = vshll.u32 %v317, 16
        %v381 = vrot.slane %v379, 1
        %v382 = vsel %vm330, %v377, %v381
        %v383 = vshrl.u32 %v317, 16
        %v385 = vor.u32 %v383, %v381
        %v387 = vshll.u32 %v318, 16
        %v389 = vrot.slane %v387, 1
        %v390 = vsel %vm330, %v385, %v389
        %v391 = vshrl.u32 %v318, 16
        %v393 = vor.u32 %v391, %v389
        %v395 = vshll.u32 %v319, 16
        %v397 = vrot.slane %v395, 1
        %v398 = vsel %vm330, %v393, %v397
        %v399 = vshrl.u32 %v319, 16
        %v401 = vor.u32 %v399, %v397
        %v403 = vshll.u32 %v320, 16
        %v405 = vrot.slane %v403, 1
        %v406 = vsel %vm330, %v401, %v405
        %v407 = vshrl.u32 %v320, 16
        %v409 = vor.u32 %v407, %v405
        %v411 = vshll.u32 %v321, 16
        %v413 = vrot.slane %v411, 1
        %v414 = vsel %vm330, %v409, %v413
        %v415 = vshrl.u32 %v321, 16
        %v417 = vor.u32 %v415, %v413
        %v419 = vshll.u32 %v322, 16
        %v421 = vrot.slane %v419, 1
        %v422 = vsel %vm330, %v417, %v421
        %v423 = vshrl.u32 %v322, 16
        %v425 = vor.u32 %v423, %v421
        %v427 = vshll.u32 %v323, 16
        %v429 = vrot.slane %v427, 1
        %v430 = vsel %vm330, %v425, %v429
        %v431 = vshrl.u32 %v323, 16
        %v433 = vor.u32 %v431, %v429
        %v435 = vshll.u32 %v324, 16
        %v437 = vrot.slane %v435, 1
        %v438 = vsel %vm330, %v433, %v437
        %v439 = vshrl.u32 %v324, 16
        %v441 = vor.u32 %v439, %v437
        %v443 = vshll.u32 %v325, 16
        %v445 = vrot.slane %v443, 1
        %v446 = vsel %vm330, %v441, %v445
        %v447 = vshrl.u32 %v325, 16
        %v449 = vor.u32 %v447, %v445
        %v451 = vshll.u32 %v326, 16
        %v453 = vrot.slane %v451, 1
        %v454 = vsel %vm330, %v449, %v453
        %v455 = vshrl.u32 %v326, 16
        %v457 = vor.u32 %v455, %v453
        %v459 = vshll.u32 %v327, 16
        %v461 = vrot.slane %v459, 1
        %v462 = vsel %vm330, %v457, %v461
        %v463 = vshrl.u32 %v327, 16
        %v465 = vor.u32 %v463, %v461
        %v467 = vshll.u32 %v328, 16
        %v469 = vrot.slane %v467, 1
        %v470 = vsel %vm330, %v465, %v469
        %v471 = vshrl.u32 %v328, 16
        %v473 = vor.u32 %v471, %v469
        %v475 = vshll.u32 %v329, 16
        %v477 = vrot.slane %v475, 1
        %v478 = vsel %vm330, %v473, %v477
        %vm479 = vcmask 31744
        %v481 = vsel %vm479, %v342, 0
        %v484 = vsel %vm479, %v350, 0
        %v487 = vsel %vm479, %v358, 0
        %v490 = vsel %vm479, %v366, 0
        %v493 = vsel %vm479, %v374, 0
        %v496 = vsel %vm479, %v382, 0
        %v499 = vsel %vm479, %v390, 0
        %v502 = vsel %vm479, %v398, 0
        %v505 = vsel %vm479, %v406, 0
        %v508 = vsel %vm479, %v414, 0
        %v511 = vsel %vm479, %v422, 0
        %v514 = vsel %vm479, %v430, 0
        %v517 = vsel %vm479, %v438, 0
        %v520 = vsel %vm479, %v446, 0
        %v523 = vsel %vm479, %v454, 0
        %v526 = vsel %vm479, %v462, 0
        %v529 = vsel %vm479, %v470, 0
        %v532 = vsel %vm479, %v478, 0
        %vm534 = vcmask 1041408
        %v536 = vsel %vm534, %v236, 0
        %538 = vmatpush.bf16.msra.mxu0 0
        %539 = vmatpush.bf16.msra.mxu0 0
        %540 = vmatpush.bf16.msra.mxu0 0
        %541 = vmatpush.bf16.msra.mxu0 0
        %542 = vmatpush.bf16.msra.mxu0 0
        %543 = vmatpush.bf16.msra.mxu0 0
        %544 = vmatpush.bf16.msra.mxu0 0
        %545 = vmatpush.bf16.msra.mxu0 %v536
        %546 = vmatmul.bf16.gmra.mxu0 %v481
        %v547 = vpop.f32.mrf.mxu0
        %v548 = vadd.f32 0.0, %v547
        %v549 = vpop.f32.mrf.mxu0
        %v550 = vadd.f32 0.0, %v549
        %551 = vmatmul.bf16.gmra.mxu0 %v484
        %v552 = vpop.f32.mrf.mxu0
        %v553 = vadd.f32 0.0, %v552
        %v554 = vpop.f32.mrf.mxu0
        %v555 = vadd.f32 0.0, %v554
        %556 = vmatmul.bf16.gmra.mxu0 %v487
        %v557 = vpop.f32.mrf.mxu0
        %v558 = vadd.f32 0.0, %v557
        %v559 = vpop.f32.mrf.mxu0
        %v560 = vadd.f32 0.0, %v559
        %561 = vmatmul.bf16.gmra.mxu0 %v490
        %v562 = vpop.f32.mrf.mxu0
        %v563 = vadd.f32 0.0, %v562
        %v564 = vpop.f32.mrf.mxu0
        %v565 = vadd.f32 0.0, %v564
        %566 = vmatmul.bf16.gmra.mxu0 %v493
        %v567 = vpop.f32.mrf.mxu0
        %v568 = vadd.f32 0.0, %v567
        %v569 = vpop.f32.mrf.mxu0
        %v570 = vadd.f32 0.0, %v569
        %571 = vmatmul.bf16.gmra.mxu0 %v496
        %v572 = vpop.f32.mrf.mxu0
        %v573 = vadd.f32 0.0, %v572
        %v574 = vpop.f32.mrf.mxu0
        %v575 = vadd.f32 0.0, %v574
        %576 = vmatmul.bf16.gmra.mxu0 %v499
        %v577 = vpop.f32.mrf.mxu0
        %v578 = vadd.f32 0.0, %v577
        %v579 = vpop.f32.mrf.mxu0
        %v580 = vadd.f32 0.0, %v579
        %581 = vmatmul.bf16.gmra.mxu0 %v502
        %v582 = vpop.f32.mrf.mxu0
        %v583 = vadd.f32 0.0, %v582
        %v584 = vpop.f32.mrf.mxu0
        %v585 = vadd.f32 0.0, %v584
        %586 = vmatmul.bf16.gmra.mxu0 %v505
        %v587 = vpop.f32.mrf.mxu0
        %v588 = vadd.f32 0.0, %v587
        %v589 = vpop.f32.mrf.mxu0
        %v590 = vadd.f32 0.0, %v589
        %591 = vmatmul.bf16.gmra.mxu0 %v508
        %v592 = vpop.f32.mrf.mxu0
        %v593 = vadd.f32 0.0, %v592
        %v594 = vpop.f32.mrf.mxu0
        %v595 = vadd.f32 0.0, %v594
        %596 = vmatmul.bf16.gmra.mxu0 %v511
        %v597 = vpop.f32.mrf.mxu0
        %v598 = vadd.f32 0.0, %v597
        %v599 = vpop.f32.mrf.mxu0
        %v600 = vadd.f32 0.0, %v599
        %601 = vmatmul.bf16.gmra.mxu0 %v514
        %v602 = vpop.f32.mrf.mxu0
        %v603 = vadd.f32 0.0, %v602
        %v604 = vpop.f32.mrf.mxu0
        %v605 = vadd.f32 0.0, %v604
        %606 = vmatmul.bf16.gmra.mxu0 %v517
        %v607 = vpop.f32.mrf.mxu0
        %v608 = vadd.f32 0.0, %v607
        %v609 = vpop.f32.mrf.mxu0
        %v610 = vadd.f32 0.0, %v609
        %611 = vmatmul.bf16.gmra.mxu0 %v520
        %v612 = vpop.f32.mrf.mxu0
        %v613 = vadd.f32 0.0, %v612
        %v614 = vpop.f32.mrf.mxu0
        %v615 = vadd.f32 0.0, %v614
        %616 = vmatmul.bf16.gmra.mxu0 %v523
        %v617 = vpop.f32.mrf.mxu0
        %v618 = vadd.f32 0.0, %v617
        %v619 = vpop.f32.mrf.mxu0
        %v620 = vadd.f32 0.0, %v619
        %621 = vmatmul.bf16.gmra.mxu0 %v526
        %v622 = vpop.f32.mrf.mxu0
        %v623 = vadd.f32 0.0, %v622
        %v624 = vpop.f32.mrf.mxu0
        %v625 = vadd.f32 0.0, %v624
        %626 = vmatmul.bf16.gmra.mxu0 %v529
        %v627 = vpop.f32.mrf.mxu0
        %v628 = vadd.f32 0.0, %v627
        %v629 = vpop.f32.mrf.mxu0
        %v630 = vadd.f32 0.0, %v629
        %631 = vmatmul.bf16.gmra.mxu0 %v532
        %v632 = vpop.f32.mrf.mxu0
        %v633 = vadd.f32 0.0, %v632
        %v634 = vpop.f32.mrf.mxu0
        %v635 = vadd.f32 0.0, %v634
        %636 = vdwg.mxu0
        %v637 = vsel %vm479, %v311, 0
        %v639 = vsel %vm479, %v312, 0
        %v641 = vsel %vm479, %v313, 0
        %v643 = vsel %vm479, %v314, 0
        %v645 = vsel %vm479, %v315, 0
        %v647 = vsel %vm479, %v316, 0
        %v649 = vsel %vm479, %v317, 0
        %v651 = vsel %vm479, %v318, 0
        %v653 = vsel %vm479, %v319, 0
        %v655 = vsel %vm479, %v320, 0
        %v657 = vsel %vm479, %v321, 0
        %v659 = vsel %vm479, %v322, 0
        %v661 = vsel %vm479, %v323, 0
        %v663 = vsel %vm479, %v324, 0
        %v665 = vsel %vm479, %v325, 0
        %v667 = vsel %vm479, %v326, 0
        %v669 = vsel %vm479, %v327, 0
        %v671 = vsel %vm479, %v328, 0
        %v674 = vsel %vm534, %v233, 0
        %676 = vmatpush.bf16.msra.mxu0 0
        %677 = vmatpush.bf16.msra.mxu0 0
        %678 = vmatpush.bf16.msra.mxu0 0
        %679 = vmatpush.bf16.msra.mxu0 0
        %680 = vmatpush.bf16.msra.mxu0 0
        %681 = vmatpush.bf16.msra.mxu0 0
        %682 = vmatpush.bf16.msra.mxu0 0
        %683 = vmatpush.bf16.msra.mxu0 %v674
        %684 = vmatmul.bf16.gmra.mxu0 %v637
        %v685 = vpop.f32.mrf.mxu0
        %v686 = vadd.f32 %v548, %v685
        %v687 = vpop.f32.mrf.mxu0
        %v688 = vadd.f32 %v550, %v687
        %689 = vmatmul.bf16.gmra.mxu0 %v639
        %v690 = vpop.f32.mrf.mxu0
        %v691 = vadd.f32 %v553, %v690
        %v692 = vpop.f32.mrf.mxu0
        %v693 = vadd.f32 %v555, %v692
        %694 = vmatmul.bf16.gmra.mxu0 %v641
        %v695 = vpop.f32.mrf.mxu0
        %v696 = vadd.f32 %v558, %v695
        %v697 = vpop.f32.mrf.mxu0
        %v698 = vadd.f32 %v560, %v697
        %699 = vmatmul.bf16.gmra.mxu0 %v643
        %v700 = vpop.f32.mrf.mxu0
        %v701 = vadd.f32 %v563, %v700
        %v702 = vpop.f32.mrf.mxu0
        %v703 = vadd.f32 %v565, %v702
        %704 = vmatmul.bf16.gmra.mxu0 %v645
        %v705 = vpop.f32.mrf.mxu0
        %v706 = vadd.f32 %v568, %v705
        %v707 = vpop.f32.mrf.mxu0
        %v708 = vadd.f32 %v570, %v707
        %709 = vmatmul.bf16.gmra.mxu0 %v647
        %v710 = vpop.f32.mrf.mxu0
        %v711 = vadd.f32 %v573, %v710
        %v712 = vpop.f32.mrf.mxu0
        %v713 = vadd.f32 %v575, %v712
        %714 = vmatmul.bf16.gmra.mxu0 %v649
        %v715 = vpop.f32.mrf.mxu0
        %v716 = vadd.f32 %v578, %v715
        %v717 = vpop.f32.mrf.mxu0
        %v718 = vadd.f32 %v580, %v717
        %719 = vmatmul.bf16.gmra.mxu0 %v651
        %v720 = vpop.f32.mrf.mxu0
        %v721 = vadd.f32 %v583, %v720
        %v722 = vpop.f32.mrf.mxu0
        %v723 = vadd.f32 %v585, %v722
        %724 = vmatmul.bf16.gmra.mxu0 %v653
        %v725 = vpop.f32.mrf.mxu0
        %v726 = vadd.f32 %v588, %v725
        %v727 = vpop.f32.mrf.mxu0
        %v728 = vadd.f32 %v590, %v727
        %729 = vmatmul.bf16.gmra.mxu0 %v655
        %v730 = vpop.f32.mrf.mxu0
        %v731 = vadd.f32 %v593, %v730
        %v732 = vpop.f32.mrf.mxu0
        %v733 = vadd.f32 %v595, %v732
        %734 = vmatmul.bf16.gmra.mxu0 %v657
        %v735 = vpop.f32.mrf.mxu0
        %v736 = vadd.f32 %v598, %v735
        %v737 = vpop.f32.mrf.mxu0
        %v738 = vadd.f32 %v600, %v737
        %739 = vmatmul.bf16.gmra.mxu0 %v659
        %v740 = vpop.f32.mrf.mxu0
        %v741 = vadd.f32 %v603, %v740
        %v742 = vpop.f32.mrf.mxu0
        %v743 = vadd.f32 %v605, %v742
        %744 = vmatmul.bf16.gmra.mxu0 %v661
        %v745 = vpop.f32.mrf.mxu0
        %v746 = vadd.f32 %v608, %v745
        %v747 = vpop.f32.mrf.mxu0
        %v748 = vadd.f32 %v610, %v747
        %749 = vmatmul.bf16.gmra.mxu0 %v663
        %v750 = vpop.f32.mrf.mxu0
        %v751 = vadd.f32 %v613, %v750
        %v752 = vpop.f32.mrf.mxu0
        %v753 = vadd.f32 %v615, %v752
        %754 = vmatmul.bf16.gmra.mxu0 %v665
        %v755 = vpop.f32.mrf.mxu0
        %v756 = vadd.f32 %v618, %v755
        %v757 = vpop.f32.mrf.mxu0
        %v758 = vadd.f32 %v620, %v757
        %759 = vmatmul.bf16.gmra.mxu0 %v667
        %v760 = vpop.f32.mrf.mxu0
        %v761 = vadd.f32 %v623, %v760
        %v762 = vpop.f32.mrf.mxu0
        %v763 = vadd.f32 %v625, %v762
        %764 = vmatmul.bf16.gmra.mxu0 %v669
        %v765 = vpop.f32.mrf.mxu0
        %v766 = vadd.f32 %v628, %v765
        %v767 = vpop.f32.mrf.mxu0
        %v768 = vadd.f32 %v630, %v767
        %769 = vmatmul.bf16.gmra.mxu0 %v671
        %v770 = vpop.f32.mrf.mxu0
        %v771 = vadd.f32 %v633, %v770
        %v772 = vpop.f32.mrf.mxu0
        %v773 = vadd.f32 %v635, %v772
        %774 = vdwg.mxu0
        %v775 = vld [vmem:[%s195] sm:$0xe]
        %s776 = scalar_lea.vmem %s1, 4
        %v777 = vld [vmem:[%s776] sm:$0x3]
        %v779 = vunpack.c.l.b16 %v775
        %v780 = vpack.c.b16 %v275, %v779
        %vm781 = vcmask 1046528
        %v782 = vrot.slane %v780, 1
        %v783 = vrot.slane %v312, 1
        %v784 = vsel %vm781, %v782, %v783
        %v785 = vrot.slane %v313, 1
        %v786 = vsel %vm781, %v783, %v785
        %v787 = vrot.slane %v314, 1
        %v788 = vsel %vm781, %v785, %v787
        %v789 = vrot.slane %v315, 1
        %v790 = vsel %vm781, %v787, %v789
        %v791 = vrot.slane %v316, 1
        %v792 = vsel %vm781, %v789, %v791
        %v793 = vrot.slane %v317, 1
        %v794 = vsel %vm781, %v791, %v793
        %v795 = vrot.slane %v318, 1
        %v796 = vsel %vm781, %v793, %v795
        %v797 = vrot.slane %v319, 1
        %v798 = vsel %vm781, %v795, %v797
        %v799 = vrot.slane %v320, 1
        %v800 = vsel %vm781, %v797, %v799
        %v801 = vrot.slane %v321, 1
        %v802 = vsel %vm781, %v799, %v801
        %v803 = vrot.slane %v322, 1
        %v804 = vsel %vm781, %v801, %v803
        %v805 = vrot.slane %v323, 1
        %v806 = vsel %vm781, %v803, %v805
        %v807 = vrot.slane %v324, 1
        %v808 = vsel %vm781, %v805, %v807
        %v809 = vrot.slane %v325, 1
        %v810 = vsel %vm781, %v807, %v809
        %v811 = vrot.slane %v326, 1
        %v812 = vsel %vm781, %v809, %v811
        %v813 = vrot.slane %v327, 1
        %v814 = vsel %vm781, %v811, %v813
        %v815 = vrot.slane %v328, 1
        %v816 = vsel %vm781, %v813, %v815
        %v817 = vrot.slane %v329, 1
        %v818 = vsel %vm781, %v815, %v817
        %v820 = vsel %vm479, %v784, 0
        %v823 = vsel %vm479, %v786, 0
        %v826 = vsel %vm479, %v788, 0
        %v829 = vsel %vm479, %v790, 0
        %v832 = vsel %vm479, %v792, 0
        %v835 = vsel %vm479, %v794, 0
        %v838 = vsel %vm479, %v796, 0
        %v841 = vsel %vm479, %v798, 0
        %v844 = vsel %vm479, %v800, 0
        %v847 = vsel %vm479, %v802, 0
        %v850 = vsel %vm479, %v804, 0
        %v853 = vsel %vm479, %v806, 0
        %v856 = vsel %vm479, %v808, 0
        %v859 = vsel %vm479, %v810, 0
        %v862 = vsel %vm479, %v812, 0
        %v865 = vsel %vm479, %v814, 0
        %v868 = vsel %vm479, %v816, 0
        %v871 = vsel %vm479, %v818, 0
        %v874 = vsel %vm534, %v777, 0
        %876 = vmatpush.bf16.msra.mxu0 0
        %877 = vmatpush.bf16.msra.mxu0 0
        %878 = vmatpush.bf16.msra.mxu0 0
        %879 = vmatpush.bf16.msra.mxu0 0
        %880 = vmatpush.bf16.msra.mxu0 0
        %881 = vmatpush.bf16.msra.mxu0 0
        %882 = vmatpush.bf16.msra.mxu0 0
        %883 = vmatpush.bf16.msra.mxu0 %v874
        %884 = vmatmul.bf16.gmra.mxu0 %v820
        %v885 = vpop.f32.mrf.mxu0
        %v886 = vadd.f32 0.0, %v885
        %v887 = vpop.f32.mrf.mxu0
        %v888 = vadd.f32 0.0, %v887
        %889 = vmatmul.bf16.gmra.mxu0 %v823
        %v890 = vpop.f32.mrf.mxu0
        %v891 = vadd.f32 0.0, %v890
        %v892 = vpop.f32.mrf.mxu0
        %v893 = vadd.f32 0.0, %v892
        %894 = vmatmul.bf16.gmra.mxu0 %v826
        %v895 = vpop.f32.mrf.mxu0
        %v896 = vadd.f32 0.0, %v895
        %v897 = vpop.f32.mrf.mxu0
        %v898 = vadd.f32 0.0, %v897
        %899 = vmatmul.bf16.gmra.mxu0 %v829
        %v900 = vpop.f32.mrf.mxu0
        %v901 = vadd.f32 0.0, %v900
        %v902 = vpop.f32.mrf.mxu0
        %v903 = vadd.f32 0.0, %v902
        %904 = vmatmul.bf16.gmra.mxu0 %v832
        %v905 = vpop.f32.mrf.mxu0
        %v906 = vadd.f32 0.0, %v905
        %v907 = vpop.f32.mrf.mxu0
        %v908 = vadd.f32 0.0, %v907
        %909 = vmatmul.bf16.gmra.mxu0 %v835
        %v910 = vpop.f32.mrf.mxu0
        %v911 = vadd.f32 0.0, %v910
        %v912 = vpop.f32.mrf.mxu0
        %v913 = vadd.f32 0.0, %v912
        %914 = vmatmul.bf16.gmra.mxu0 %v838
        %v915 = vpop.f32.mrf.mxu0
        %v916 = vadd.f32 0.0, %v915
        %v917 = vpop.f32.mrf.mxu0
        %v918 = vadd.f32 0.0, %v917
        %919 = vmatmul.bf16.gmra.mxu0 %v841
        %v920 = vpop.f32.mrf.mxu0
        %v921 = vadd.f32 0.0, %v920
        %v922 = vpop.f32.mrf.mxu0
        %v923 = vadd.f32 0.0, %v922
        %924 = vmatmul.bf16.gmra.mxu0 %v844
        %v925 = vpop.f32.mrf.mxu0
        %v926 = vadd.f32 0.0, %v925
        %v927 = vpop.f32.mrf.mxu0
        %v928 = vadd.f32 0.0, %v927
        %929 = vmatmul.bf16.gmra.mxu0 %v847
        %v930 = vpop.f32.mrf.mxu0
        %v931 = vadd.f32 0.0, %v930
        %v932 = vpop.f32.mrf.mxu0
        %v933 = vadd.f32 0.0, %v932
        %934 = vmatmul.bf16.gmra.mxu0 %v850
        %v935 = vpop.f32.mrf.mxu0
        %v936 = vadd.f32 0.0, %v935
        %v937 = vpop.f32.mrf.mxu0
        %v938 = vadd.f32 0.0, %v937
        %939 = vmatmul.bf16.gmra.mxu0 %v853
        %v940 = vpop.f32.mrf.mxu0
        %v941 = vadd.f32 0.0, %v940
        %v942 = vpop.f32.mrf.mxu0
        %v943 = vadd.f32 0.0, %v942
        %944 = vmatmul.bf16.gmra.mxu0 %v856
        %v945 = vpop.f32.mrf.mxu0
        %v946 = vadd.f32 0.0, %v945
        %v947 = vpop.f32.mrf.mxu0
        %v948 = vadd.f32 0.0, %v947
        %949 = vmatmul.bf16.gmra.mxu0 %v859
        %v950 = vpop.f32.mrf.mxu0
        %v951 = vadd.f32 0.0, %v950
        %v952 = vpop.f32.mrf.mxu0
        %v953 = vadd.f32 0.0, %v952
        %954 = vmatmul.bf16.gmra.mxu0 %v862
        %v955 = vpop.f32.mrf.mxu0
        %v956 = vadd.f32 0.0, %v955
        %v957 = vpop.f32.mrf.mxu0
        %v958 = vadd.f32 0.0, %v957
        %959 = vmatmul.bf16.gmra.mxu0 %v865
        %v960 = vpop.f32.mrf.mxu0
        %v961 = vadd.f32 0.0, %v960
        %v962 = vpop.f32.mrf.mxu0
        %v963 = vadd.f32 0.0, %v962
        %964 = vmatmul.bf16.gmra.mxu0 %v868
        %v965 = vpop.f32.mrf.mxu0
        %v966 = vadd.f32 0.0, %v965
        %v967 = vpop.f32.mrf.mxu0
        %v968 = vadd.f32 0.0, %v967
        %969 = vmatmul.bf16.gmra.mxu0 %v871
        %v970 = vpop.f32.mrf.mxu0
        %v971 = vadd.f32 0.0, %v970
        %v972 = vpop.f32.mrf.mxu0
        %v973 = vadd.f32 0.0, %v972
        %974 = vdwg.mxu0
        %v975 = vadd.f32 %v686, %v886
        %v976 = vadd.f32 %v688, %v888
        %v977 = vadd.f32 %v691, %v891
        %v978 = vadd.f32 %v693, %v893
        %v979 = vadd.f32 %v696, %v896
        %v980 = vadd.f32 %v698, %v898
        %v981 = vadd.f32 %v701, %v901
        %v982 = vadd.f32 %v703, %v903
        %v983 = vadd.f32 %v706, %v906
        %v984 = vadd.f32 %v708, %v908
        %v985 = vadd.f32 %v711, %v911
        %v986 = vadd.f32 %v713, %v913
        %v987 = vadd.f32 %v716, %v916
        %v988 = vadd.f32 %v718, %v918
        %v989 = vadd.f32 %v721, %v921
        %v990 = vadd.f32 %v723, %v923
        %v991 = vadd.f32 %v726, %v926
        %v992 = vadd.f32 %v728, %v928
        %v993 = vadd.f32 %v731, %v931
        %v994 = vadd.f32 %v733, %v933
        %v995 = vadd.f32 %v736, %v936
        %v996 = vadd.f32 %v738, %v938
        %v997 = vadd.f32 %v741, %v941
        %v998 = vadd.f32 %v743, %v943
        %v999 = vadd.f32 %v746, %v946
        %v1000 = vadd.f32 %v748, %v948
        %v1001 = vadd.f32 %v751, %v951
        %v1002 = vadd.f32 %v753, %v953
        %v1003 = vadd.f32 %v756, %v956
        %v1004 = vadd.f32 %v758, %v958
        %v1005 = vadd.f32 %v761, %v961
        %v1006 = vadd.f32 %v763, %v963
        %v1007 = vadd.f32 %v766, %v966
        %v1008 = vadd.f32 %v768, %v968
        %v1009 = vadd.f32 %v771, %v971
        %v1010 = vadd.f32 %v773, %v973
        %v1011 = vld [vmem:[%s195 + $0x8] sm:$0xe]
        %v1012 = vld [vmem:[%s195 + $0xc] sm:$0xf]
        %v1013 = vld [vmem:[%s195 + $0x10] sm:$0xf]
        %v1014 = vld [vmem:[%s195 + $0x14] sm:$0xf]
        %v1015 = vld [vmem:[%s195 + $0x18] sm:$0xf]
        %v1016 = vld [vmem:[%s195 + $0x1c] sm:$0xf]
        %v1017 = vld [vmem:[%s195 + $0x20] sm:$0xf]
        %v1018 = vld [vmem:[%s195 + $0x24] sm:$0xf]
        %v1019 = vld [vmem:[%s195 + $0x28] sm:$0xf]
        %v1020 = vld [vmem:[%s195 + $0x2c] sm:$0xf]
        %v1021 = vld [vmem:[%s195 + $0x30] sm:$0xf]
        %v1022 = vld [vmem:[%s195 + $0x34] sm:$0xf]
        %v1023 = vld [vmem:[%s195 + $0x38] sm:$0xf]
        %v1024 = vld [vmem:[%s195 + $0x3c] sm:$0xf]
        %v1025 = vld [vmem:[%s195 + $0x40] sm:$0xf]
        %v1026 = vld [vmem:[%s195 + $0x44] sm:$0xf]
        %v1027 = vld [vmem:[%s195 + $0x48] sm:$0xf]
        %v1028 = vld [vmem:[%s195 + $0x4c] sm:$0xf]
        %v1029 = vld [vmem:[%s195 + $0x50] sm:$0xf]
        %v1030 = vld [vmem:[%s195 + $0x54] sm:$0xf]
        %v1031 = vld [vmem:[%s195 + $0x58] sm:$0xf]
        %v1032 = vld [vmem:[%s195 + $0x5c] sm:$0xf]
        %v1033 = vld [vmem:[%s195 + $0x60] sm:$0xf]
        %v1034 = vld [vmem:[%s195 + $0x64] sm:$0xf]
        %v1035 = vld [vmem:[%s195 + $0x68] sm:$0xf]
        %v1036 = vld [vmem:[%s195 + $0x6c] sm:$0xf]
        %v1037 = vld [vmem:[%s195 + $0x70] sm:$0xf]
        %v1038 = vld [vmem:[%s195 + $0x74] sm:$0xf]
        %v1039 = vld [vmem:[%s195 + $0x78] sm:$0xf]
        %v1040 = vld [vmem:[%s195 + $0x7c] sm:$0xf]
        %v1041 = vld [vmem:[%s195 + $0x80] sm:$0xf]
        %v1042 = vld [vmem:[%s195 + $0x84] sm:$0xf]
        %v1043 = vld [vmem:[%s195 + $0x88] sm:$0xf]
        %v1044 = vld [vmem:[%s195 + $0x8c] sm:$0xf]
        %v1045 = vld [vmem:[%s195 + $0x90] sm:$0xf]
        %v1046 = vld [vmem:[%s195 + $0x94] sm:$0xf]
        %v1047 = vld [vmem:[%s195 + $0x98] sm:$0x1]
        %s1048 = scalar_lea.vmem %s1, 6
        %v1049 = vld [vmem:[%s1048] sm:$0x3]
        %v1087 = vunpack.c.l.b16 %v1011
        %v1088 = vunpack.c.l.b16 %v1012
        %v1089 = vunpack.c.l.b16 %v1013
        %v1090 = vunpack.c.l.b16 %v1014
        %v1091 = vunpack.c.l.b16 %v1015
        %v1092 = vunpack.c.l.b16 %v1016
        %v1093 = vunpack.c.l.b16 %v1017
        %v1094 = vunpack.c.l.b16 %v1018
        %v1095 = vunpack.c.l.b16 %v1019
        %v1096 = vunpack.c.l.b16 %v1020
        %v1097 = vunpack.c.l.b16 %v1021
        %v1098 = vunpack.c.l.b16 %v1022
        %v1099 = vunpack.c.l.b16 %v1023
        %v1100 = vunpack.c.l.b16 %v1024
        %v1101 = vunpack.c.l.b16 %v1025
        %v1102 = vunpack.c.l.b16 %v1026
        %v1103 = vunpack.c.l.b16 %v1027
        %v1104 = vunpack.c.l.b16 %v1028
        %v1105 = vunpack.c.l.b16 %v1029
        %v1106 = vunpack.c.l.b16 %v1030
        %v1107 = vunpack.c.l.b16 %v1031
        %v1108 = vunpack.c.l.b16 %v1032
        %v1109 = vunpack.c.l.b16 %v1033
        %v1110 = vunpack.c.l.b16 %v1034
        %v1111 = vunpack.c.l.b16 %v1035
        %v1112 = vunpack.c.l.b16 %v1036
        %v1113 = vunpack.c.l.b16 %v1037
        %v1114 = vunpack.c.l.b16 %v1038
        %v1115 = vunpack.c.l.b16 %v1039
        %v1116 = vunpack.c.l.b16 %v1040
        %v1117 = vunpack.c.l.b16 %v1041
        %v1118 = vunpack.c.l.b16 %v1042
        %v1119 = vunpack.c.l.b16 %v1043
        %v1120 = vunpack.c.l.b16 %v1044
        %v1121 = vunpack.c.l.b16 %v1045
        %v1122 = vunpack.c.l.b16 %v1046
        %v1123 = vunpack.c.l.b16 %v1047
        %v1124 = vpack.c.b16 %v1088, %v1087
        %v1125 = vpack.c.b16 %v1090, %v1089
        %v1126 = vpack.c.b16 %v1092, %v1091
        %v1127 = vpack.c.b16 %v1094, %v1093
        %v1128 = vpack.c.b16 %v1096, %v1095
        %v1129 = vpack.c.b16 %v1098, %v1097
        %v1130 = vpack.c.b16 %v1100, %v1099
        %v1131 = vpack.c.b16 %v1102, %v1101
        %v1132 = vpack.c.b16 %v1104, %v1103
        %v1133 = vpack.c.b16 %v1106, %v1105
        %v1134 = vpack.c.b16 %v1108, %v1107
        %v1135 = vpack.c.b16 %v1110, %v1109
        %v1136 = vpack.c.b16 %v1112, %v1111
        %v1137 = vpack.c.b16 %v1114, %v1113
        %v1138 = vpack.c.b16 %v1116, %v1115
        %v1139 = vpack.c.b16 %v1118, %v1117
        %v1140 = vpack.c.b16 %v1120, %v1119
        %v1141 = vpack.c.b16 %v1122, %v1121
        %v1142 = vpack.c.b16 %v1123, %v1123
        %v1143 = vrot.slane %v1124, 1
        %v1144 = vrot.slane %v1125, 1
        %v1145 = vsel %vm781, %v1143, %v1144
        %v1146 = vrot.slane %v1126, 1
        %v1147 = vsel %vm781, %v1144, %v1146
        %v1148 = vrot.slane %v1127, 1
        %v1149 = vsel %vm781, %v1146, %v1148
        %v1150 = vrot.slane %v1128, 1
        %v1151 = vsel %vm781, %v1148, %v1150
        %v1152 = vrot.slane %v1129, 1
        %v1153 = vsel %vm781, %v1150, %v1152
        %v1154 = vrot.slane %v1130, 1
        %v1155 = vsel %vm781, %v1152, %v1154
        %v1156 = vrot.slane %v1131, 1
        %v1157 = vsel %vm781, %v1154, %v1156
        %v1158 = vrot.slane %v1132, 1
        %v1159 = vsel %vm781, %v1156, %v1158
        %v1160 = vrot.slane %v1133, 1
        %v1161 = vsel %vm781, %v1158, %v1160
        %v1162 = vrot.slane %v1134, 1
        %v1163 = vsel %vm781, %v1160, %v1162
        %v1164 = vrot.slane %v1135, 1
        %v1165 = vsel %vm781, %v1162, %v1164
        %v1166 = vrot.slane %v1136, 1
        %v1167 = vsel %vm781, %v1164, %v1166
        %v1168 = vrot.slane %v1137, 1
        %v1169 = vsel %vm781, %v1166, %v1168
        %v1170 = vrot.slane %v1138, 1
        %v1171 = vsel %vm781, %v1168, %v1170
        %v1172 = vrot.slane %v1139, 1
        %v1173 = vsel %vm781, %v1170, %v1172
        %v1174 = vrot.slane %v1140, 1
        %v1175 = vsel %vm781, %v1172, %v1174
        %v1176 = vrot.slane %v1141, 1
        %v1177 = vsel %vm781, %v1174, %v1176
        %v1178 = vrot.slane %v1142, 1
        %v1179 = vsel %vm781, %v1176, %v1178
        %v1181 = vsel %vm479, %v1145, 0
        %v1184 = vsel %vm479, %v1147, 0
        %v1187 = vsel %vm479, %v1149, 0
        %v1190 = vsel %vm479, %v1151, 0
        %v1193 = vsel %vm479, %v1153, 0
        %v1196 = vsel %vm479, %v1155, 0
        %v1199 = vsel %vm479, %v1157, 0
        %v1202 = vsel %vm479, %v1159, 0
        %v1205 = vsel %vm479, %v1161, 0
        %v1208 = vsel %vm479, %v1163, 0
        %v1211 = vsel %vm479, %v1165, 0
        %v1214 = vsel %vm479, %v1167, 0
        %v1217 = vsel %vm479, %v1169, 0
        %v1220 = vsel %vm479, %v1171, 0
        %v1223 = vsel %vm479, %v1173, 0
        %v1226 = vsel %vm479, %v1175, 0
        %v1229 = vsel %vm479, %v1177, 0
        %v1232 = vsel %vm479, %v1179, 0
        %v1235 = vsel %vm534, %v1049, 0
        %1237 = vmatpush.bf16.msra.mxu0 0
        %1238 = vmatpush.bf16.msra.mxu0 0
        %1239 = vmatpush.bf16.msra.mxu0 0
        %1240 = vmatpush.bf16.msra.mxu0 0
        %1241 = vmatpush.bf16.msra.mxu0 0
        %1242 = vmatpush.bf16.msra.mxu0 0
        %1243 = vmatpush.bf16.msra.mxu0 0
        %1244 = vmatpush.bf16.msra.mxu0 %v1235
        %1245 = vmatmul.bf16.gmra.mxu0 %v1181
        %v1246 = vpop.f32.mrf.mxu0
        %v1247 = vadd.f32 0.0, %v1246
        %v1248 = vpop.f32.mrf.mxu0
        %v1249 = vadd.f32 0.0, %v1248
        %1250 = vmatmul.bf16.gmra.mxu0 %v1184
        %v1251 = vpop.f32.mrf.mxu0
        %v1252 = vadd.f32 0.0, %v1251
        %v1253 = vpop.f32.mrf.mxu0
        %v1254 = vadd.f32 0.0, %v1253
        %1255 = vmatmul.bf16.gmra.mxu0 %v1187
        %v1256 = vpop.f32.mrf.mxu0
        %v1257 = vadd.f32 0.0, %v1256
        %v1258 = vpop.f32.mrf.mxu0
        %v1259 = vadd.f32 0.0, %v1258
        %1260 = vmatmul.bf16.gmra.mxu0 %v1190
        %v1261 = vpop.f32.mrf.mxu0
        %v1262 = vadd.f32 0.0, %v1261
        %v1263 = vpop.f32.mrf.mxu0
        %v1264 = vadd.f32 0.0, %v1263
        %1265 = vmatmul.bf16.gmra.mxu0 %v1193
        %v1266 = vpop.f32.mrf.mxu0
        %v1267 = vadd.f32 0.0, %v1266
        %v1268 = vpop.f32.mrf.mxu0
        %v1269 = vadd.f32 0.0, %v1268
        %1270 = vmatmul.bf16.gmra.mxu0 %v1196
        %v1271 = vpop.f32.mrf.mxu0
        %v1272 = vadd.f32 0.0, %v1271
        %v1273 = vpop.f32.mrf.mxu0
        %v1274 = vadd.f32 0.0, %v1273
        %1275 = vmatmul.bf16.gmra.mxu0 %v1199
        %v1276 = vpop.f32.mrf.mxu0
        %v1277 = vadd.f32 0.0, %v1276
        %v1278 = vpop.f32.mrf.mxu0
        %v1279 = vadd.f32 0.0, %v1278
        %1280 = vmatmul.bf16.gmra.mxu0 %v1202
        %v1281 = vpop.f32.mrf.mxu0
        %v1282 = vadd.f32 0.0, %v1281
        %v1283 = vpop.f32.mrf.mxu0
        %v1284 = vadd.f32 0.0, %v1283
        %1285 = vmatmul.bf16.gmra.mxu0 %v1205
        %v1286 = vpop.f32.mrf.mxu0
        %v1287 = vadd.f32 0.0, %v1286
        %v1288 = vpop.f32.mrf.mxu0
        %v1289 = vadd.f32 0.0, %v1288
        %1290 = vmatmul.bf16.gmra.mxu0 %v1208
        %v1291 = vpop.f32.mrf.mxu0
        %v1292 = vadd.f32 0.0, %v1291
        %v1293 = vpop.f32.mrf.mxu0
        %v1294 = vadd.f32 0.0, %v1293
        %1295 = vmatmul.bf16.gmra.mxu0 %v1211
        %v1296 = vpop.f32.mrf.mxu0
        %v1297 = vadd.f32 0.0, %v1296
        %v1298 = vpop.f32.mrf.mxu0
        %v1299 = vadd.f32 0.0, %v1298
        %1300 = vmatmul.bf16.gmra.mxu0 %v1214
        %v1301 = vpop.f32.mrf.mxu0
        %v1302 = vadd.f32 0.0, %v1301
        %v1303 = vpop.f32.mrf.mxu0
        %v1304 = vadd.f32 0.0, %v1303
        %1305 = vmatmul.bf16.gmra.mxu0 %v1217
        %v1306 = vpop.f32.mrf.mxu0
        %v1307 = vadd.f32 0.0, %v1306
        %v1308 = vpop.f32.mrf.mxu0
        %v1309 = vadd.f32 0.0, %v1308
        %1310 = vmatmul.bf16.gmra.mxu0 %v1220
        %v1311 = vpop.f32.mrf.mxu0
        %v1312 = vadd.f32 0.0, %v1311
        %v1313 = vpop.f32.mrf.mxu0
        %v1314 = vadd.f32 0.0, %v1313
        %1315 = vmatmul.bf16.gmra.mxu0 %v1223
        %v1316 = vpop.f32.mrf.mxu0
        %v1317 = vadd.f32 0.0, %v1316
        %v1318 = vpop.f32.mrf.mxu0
        %v1319 = vadd.f32 0.0, %v1318
        %1320 = vmatmul.bf16.gmra.mxu0 %v1226
        %v1321 = vpop.f32.mrf.mxu0
        %v1322 = vadd.f32 0.0, %v1321
        %v1323 = vpop.f32.mrf.mxu0
        %v1324 = vadd.f32 0.0, %v1323
        %1325 = vmatmul.bf16.gmra.mxu0 %v1229
        %v1326 = vpop.f32.mrf.mxu0
        %v1327 = vadd.f32 0.0, %v1326
        %v1328 = vpop.f32.mrf.mxu0
        %v1329 = vadd.f32 0.0, %v1328
        %1330 = vmatmul.bf16.gmra.mxu0 %v1232
        %v1331 = vpop.f32.mrf.mxu0
        %v1332 = vadd.f32 0.0, %v1331
        %v1333 = vpop.f32.mrf.mxu0
        %v1334 = vadd.f32 0.0, %v1333
        %1335 = vdwg.mxu0
        %v1336 = vadd.f32 %v975, %v1247
        %v1337 = vadd.f32 %v976, %v1249
        %v1338 = vadd.f32 %v977, %v1252
        %v1339 = vadd.f32 %v978, %v1254
        %v1340 = vadd.f32 %v979, %v1257
        %v1341 = vadd.f32 %v980, %v1259
        %v1342 = vadd.f32 %v981, %v1262
        %v1343 = vadd.f32 %v982, %v1264
        %v1344 = vadd.f32 %v983, %v1267
        %v1345 = vadd.f32 %v984, %v1269
        %v1346 = vadd.f32 %v985, %v1272
        %v1347 = vadd.f32 %v986, %v1274
        %v1348 = vadd.f32 %v987, %v1277
        %v1349 = vadd.f32 %v988, %v1279
        %v1350 = vadd.f32 %v989, %v1282
        %v1351 = vadd.f32 %v990, %v1284
        %v1352 = vadd.f32 %v991, %v1287
        %v1353 = vadd.f32 %v992, %v1289
        %v1354 = vadd.f32 %v993, %v1292
        %v1355 = vadd.f32 %v994, %v1294
        %v1356 = vadd.f32 %v995, %v1297
        %v1357 = vadd.f32 %v996, %v1299
        %v1358 = vadd.f32 %v997, %v1302
        %v1359 = vadd.f32 %v998, %v1304
        %v1360 = vadd.f32 %v999, %v1307
        %v1361 = vadd.f32 %v1000, %v1309
        %v1362 = vadd.f32 %v1001, %v1312
        %v1363 = vadd.f32 %v1002, %v1314
        %v1364 = vadd.f32 %v1003, %v1317
        %v1365 = vadd.f32 %v1004, %v1319
        %v1366 = vadd.f32 %v1005, %v1322
        %v1367 = vadd.f32 %v1006, %v1324
        %v1368 = vadd.f32 %v1007, %v1327
        %v1369 = vadd.f32 %v1008, %v1329
        %v1370 = vadd.f32 %v1009, %v1332
        %v1371 = vadd.f32 %v1010, %v1334
        %v1372 = vld [vmem:[%s195 + $0x98] sm:$0x3]
        %s1373 = scalar_lea.vmem %s1, 8
        %v1374 = vld [vmem:[%s1373] sm:$0x3]
        %v1376 = vunpack.c.l.b16 %v1372
        %v1377 = vpack.c.b16 %v1376, %v1376
        %vm1378 = vsmask.f32 6400
        %v1380 = vshrl.u32 %v1124, 16
        %v1382 = vrot.slane %v1380, 1
        %v1383 = vshll.u32 %v1124, 16
        %v1385 = vrot.slane %v1383, 2
        %v1386 = vor.u32 %v1382, %v1385
        %v1388 = vshrl.u32 %v1125, 16
        %v1390 = vrot.slane %v1388, 1
        %v1391 = vshll.u32 %v1125, 16
        %v1393 = vrot.slane %v1391, 2
        %v1394 = vor.u32 %v1390, %v1393
        %v1395 = vsel %vm1378, %v1386, %v1394
        %v1397 = vshrl.u32 %v1126, 16
        %v1399 = vrot.slane %v1397, 1
        %v1400 = vshll.u32 %v1126, 16
        %v1402 = vrot.slane %v1400, 2
        %v1403 = vor.u32 %v1399, %v1402
        %v1404 = vsel %vm1378, %v1394, %v1403
        %v1406 = vshrl.u32 %v1127, 16
        %v1408 = vrot.slane %v1406, 1
        %v1409 = vshll.u32 %v1127, 16
        %v1411 = vrot.slane %v1409, 2
        %v1412 = vor.u32 %v1408, %v1411
        %v1413 = vsel %vm1378, %v1403, %v1412
        %v1415 = vshrl.u32 %v1128, 16
        %v1417 = vrot.slane %v1415, 1
        %v1418 = vshll.u32 %v1128, 16
        %v1420 = vrot.slane %v1418, 2
        %v1421 = vor.u32 %v1417, %v1420
        %v1422 = vsel %vm1378, %v1412, %v1421
        %v1424 = vshrl.u32 %v1129, 16
        %v1426 = vrot.slane %v1424, 1
        %v1427 = vshll.u32 %v1129, 16
        %v1429 = vrot.slane %v1427, 2
        %v1430 = vor.u32 %v1426, %v1429
        %v1431 = vsel %vm1378, %v1421, %v1430
        %v1433 = vshrl.u32 %v1130, 16
        %v1435 = vrot.slane %v1433, 1
        %v1436 = vshll.u32 %v1130, 16
        %v1438 = vrot.slane %v1436, 2
        %v1439 = vor.u32 %v1435, %v1438
        %v1440 = vsel %vm1378, %v1430, %v1439
        %v1442 = vshrl.u32 %v1131, 16
        %v1444 = vrot.slane %v1442, 1
        %v1445 = vshll.u32 %v1131, 16
        %v1447 = vrot.slane %v1445, 2
        %v1448 = vor.u32 %v1444, %v1447
        %v1449 = vsel %vm1378, %v1439, %v1448
        %v1451 = vshrl.u32 %v1132, 16
        %v1453 = vrot.slane %v1451, 1
        %v1454 = vshll.u32 %v1132, 16
        %v1456 = vrot.slane %v1454, 2
        %v1457 = vor.u32 %v1453, %v1456
        %v1458 = vsel %vm1378, %v1448, %v1457
        %v1460 = vshrl.u32 %v1133, 16
        %v1462 = vrot.slane %v1460, 1
        %v1463 = vshll.u32 %v1133, 16
        %v1465 = vrot.slane %v1463, 2
        %v1466 = vor.u32 %v1462, %v1465
        %v1467 = vsel %vm1378, %v1457, %v1466
        %v1469 = vshrl.u32 %v1134, 16
        %v1471 = vrot.slane %v1469, 1
        %v1472 = vshll.u32 %v1134, 16
        %v1474 = vrot.slane %v1472, 2
        %v1475 = vor.u32 %v1471, %v1474
        %v1476 = vsel %vm1378, %v1466, %v1475
        %v1478 = vshrl.u32 %v1135, 16
        %v1480 = vrot.slane %v1478, 1
        %v1481 = vshll.u32 %v1135, 16
        %v1483 = vrot.slane %v1481, 2
        %v1484 = vor.u32 %v1480, %v1483
        %v1485 = vsel %vm1378, %v1475, %v1484
        %v1487 = vshrl.u32 %v1136, 16
        %v1489 = vrot.slane %v1487, 1
        %v1490 = vshll.u32 %v1136, 16
        %v1492 = vrot.slane %v1490, 2
        %v1493 = vor.u32 %v1489, %v1492
        %v1494 = vsel %vm1378, %v1484, %v1493
        %v1496 = vshrl.u32 %v1137, 16
        %v1498 = vrot.slane %v1496, 1
        %v1499 = vshll.u32 %v1137, 16
        %v1501 = vrot.slane %v1499, 2
        %v1502 = vor.u32 %v1498, %v1501
        %v1503 = vsel %vm1378, %v1493, %v1502
        %v1505 = vshrl.u32 %v1138, 16
        %v1507 = vrot.slane %v1505, 1
        %v1508 = vshll.u32 %v1138, 16
        %v1510 = vrot.slane %v1508, 2
        %v1511 = vor.u32 %v1507, %v1510
        %v1512 = vsel %vm1378, %v1502, %v1511
        %v1514 = vshrl.u32 %v1139, 16
        %v1516 = vrot.slane %v1514, 1
        %v1517 = vshll.u32 %v1139, 16
        %v1519 = vrot.slane %v1517, 2
        %v1520 = vor.u32 %v1516, %v1519
        %v1521 = vsel %vm1378, %v1511, %v1520
        %v1523 = vshrl.u32 %v1140, 16
        %v1525 = vrot.slane %v1523, 1
        %v1526 = vshll.u32 %v1140, 16
        %v1528 = vrot.slane %v1526, 2
        %v1529 = vor.u32 %v1525, %v1528
        %v1530 = vsel %vm1378, %v1520, %v1529
        %v1532 = vshrl.u32 %v1141, 16
        %v1534 = vrot.slane %v1532, 1
        %v1535 = vshll.u32 %v1141, 16
        %v1537 = vrot.slane %v1535, 2
        %v1538 = vor.u32 %v1534, %v1537
        %v1539 = vsel %vm1378, %v1529, %v1538
        %v1541 = vshrl.u32 %v1377, 16
        %v1543 = vrot.slane %v1541, 1
        %v1544 = vshll.u32 %v1377, 16
        %v1546 = vrot.slane %v1544, 2
        %v1547 = vor.u32 %v1543, %v1546
        %v1548 = vsel %vm1378, %v1538, %v1547
        %v1550 = vsel %vm479, %v1395, 0
        %v1553 = vsel %vm479, %v1404, 0
        %v1556 = vsel %vm479, %v1413, 0
        %v1559 = vsel %vm479, %v1422, 0
        %v1562 = vsel %vm479, %v1431, 0
        %v1565 = vsel %vm479, %v1440, 0
        %v1568 = vsel %vm479, %v1449, 0
        %v1571 = vsel %vm479, %v1458, 0
        %v1574 = vsel %vm479, %v1467, 0
        %v1577 = vsel %vm479, %v1476, 0
        %v1580 = vsel %vm479, %v1485, 0
        %v1583 = vsel %vm479, %v1494, 0
        %v1586 = vsel %vm479, %v1503, 0
        %v1589 = vsel %vm479, %v1512, 0
        %v1592 = vsel %vm479, %v1521, 0
        %v1595 = vsel %vm479, %v1530, 0
        %v1598 = vsel %vm479, %v1539, 0
        %v1601 = vsel %vm479, %v1548, 0
        %v1604 = vsel %vm534, %v1374, 0
        %1606 = vmatpush.bf16.msra.mxu0 0
        %1607 = vmatpush.bf16.msra.mxu0 0
        %1608 = vmatpush.bf16.msra.mxu0 0
        %1609 = vmatpush.bf16.msra.mxu0 0
        %1610 = vmatpush.bf16.msra.mxu0 0
        %1611 = vmatpush.bf16.msra.mxu0 0
        %1612 = vmatpush.bf16.msra.mxu0 0
        %1613 = vmatpush.bf16.msra.mxu0 %v1604
        %1614 = vmatmul.bf16.gmra.mxu0 %v1550
        %v1615 = vpop.f32.mrf.mxu0
        %v1616 = vadd.f32 0.0, %v1615
        %v1617 = vpop.f32.mrf.mxu0
        %v1618 = vadd.f32 0.0, %v1617
        %1619 = vmatmul.bf16.gmra.mxu0 %v1553
        %v1620 = vpop.f32.mrf.mxu0
        %v1621 = vadd.f32 0.0, %v1620
        %v1622 = vpop.f32.mrf.mxu0
        %v1623 = vadd.f32 0.0, %v1622
        %1624 = vmatmul.bf16.gmra.mxu0 %v1556
        %v1625 = vpop.f32.mrf.mxu0
        %v1626 = vadd.f32 0.0, %v1625
        %v1627 = vpop.f32.mrf.mxu0
        %v1628 = vadd.f32 0.0, %v1627
        %1629 = vmatmul.bf16.gmra.mxu0 %v1559
        %v1630 = vpop.f32.mrf.mxu0
        %v1631 = vadd.f32 0.0, %v1630
        %v1632 = vpop.f32.mrf.mxu0
        %v1633 = vadd.f32 0.0, %v1632
        %1634 = vmatmul.bf16.gmra.mxu0 %v1562
        %v1635 = vpop.f32.mrf.mxu0
        %v1636 = vadd.f32 0.0, %v1635
        %v1637 = vpop.f32.mrf.mxu0
        %v1638 = vadd.f32 0.0, %v1637
        %1639 = vmatmul.bf16.gmra.mxu0 %v1565
        %v1640 = vpop.f32.mrf.mxu0
        %v1641 = vadd.f32 0.0, %v1640
        %v1642 = vpop.f32.mrf.mxu0
        %v1643 = vadd.f32 0.0, %v1642
        %1644 = vmatmul.bf16.gmra.mxu0 %v1568
        %v1645 = vpop.f32.mrf.mxu0
        %v1646 = vadd.f32 0.0, %v1645
        %v1647 = vpop.f32.mrf.mxu0
        %v1648 = vadd.f32 0.0, %v1647
        %1649 = vmatmul.bf16.gmra.mxu0 %v1571
        %v1650 = vpop.f32.mrf.mxu0
        %v1651 = vadd.f32 0.0, %v1650
        %v1652 = vpop.f32.mrf.mxu0
        %v1653 = vadd.f32 0.0, %v1652
        %1654 = vmatmul.bf16.gmra.mxu0 %v1574
        %v1655 = vpop.f32.mrf.mxu0
        %v1656 = vadd.f32 0.0, %v1655
        %v1657 = vpop.f32.mrf.mxu0
        %v1658 = vadd.f32 0.0, %v1657
        %1659 = vmatmul.bf16.gmra.mxu0 %v1577
        %v1660 = vpop.f32.mrf.mxu0
        %v1661 = vadd.f32 0.0, %v1660
        %v1662 = vpop.f32.mrf.mxu0
        %v1663 = vadd.f32 0.0, %v1662
        %1664 = vmatmul.bf16.gmra.mxu0 %v1580
        %v1665 = vpop.f32.mrf.mxu0
        %v1666 = vadd.f32 0.0, %v1665
        %v1667 = vpop.f32.mrf.mxu0
        %v1668 = vadd.f32 0.0, %v1667
        %1669 = vmatmul.bf16.gmra.mxu0 %v1583
        %v1670 = vpop.f32.mrf.mxu0
        %v1671 = vadd.f32 0.0, %v1670
        %v1672 = vpop.f32.mrf.mxu0
        %v1673 = vadd.f32 0.0, %v1672
        %1674 = vmatmul.bf16.gmra.mxu0 %v1586
        %v1675 = vpop.f32.mrf.mxu0
        %v1676 = vadd.f32 0.0, %v1675
        %v1677 = vpop.f32.mrf.mxu0
        %v1678 = vadd.f32 0.0, %v1677
        %1679 = vmatmul.bf16.gmra.mxu0 %v1589
        %v1680 = vpop.f32.mrf.mxu0
        %v1681 = vadd.f32 0.0, %v1680
        %v1682 = vpop.f32.mrf.mxu0
        %v1683 = vadd.f32 0.0, %v1682
        %1684 = vmatmul.bf16.gmra.mxu0 %v1592
        %v1685 = vpop.f32.mrf.mxu0
        %v1686 = vadd.f32 0.0, %v1685
        %v1687 = vpop.f32.mrf.mxu0
        %v1688 = vadd.f32 0.0, %v1687
        %1689 = vmatmul.bf16.gmra.mxu0 %v1595
        %v1690 = vpop.f32.mrf.mxu0
        %v1691 = vadd.f32 0.0, %v1690
        %v1692 = vpop.f32.mrf.mxu0
        %v1693 = vadd.f32 0.0, %v1692
        %1694 = vmatmul.bf16.gmra.mxu0 %v1598
        %v1695 = vpop.f32.mrf.mxu0
        %v1696 = vadd.f32 0.0, %v1695
        %v1697 = vpop.f32.mrf.mxu0
        %v1698 = vadd.f32 0.0, %v1697
        %1699 = vmatmul.bf16.gmra.mxu0 %v1601
        %v1700 = vpop.f32.mrf.mxu0
        %v1701 = vadd.f32 0.0, %v1700
        %v1702 = vpop.f32.mrf.mxu0
        %v1703 = vadd.f32 0.0, %v1702
        %1704 = vdwg.mxu0
        %v1705 = vadd.f32 %v1336, %v1616
        %v1706 = vadd.f32 %v1337, %v1618
        %v1707 = vadd.f32 %v1338, %v1621
        %v1708 = vadd.f32 %v1339, %v1623
        %v1709 = vadd.f32 %v1340, %v1626
        %v1710 = vadd.f32 %v1341, %v1628
        %v1711 = vadd.f32 %v1342, %v1631
        %v1712 = vadd.f32 %v1343, %v1633
        %v1713 = vadd.f32 %v1344, %v1636
        %v1714 = vadd.f32 %v1345, %v1638
        %v1715 = vadd.f32 %v1346, %v1641
        %v1716 = vadd.f32 %v1347, %v1643
        %v1717 = vadd.f32 %v1348, %v1646
        %v1718 = vadd.f32 %v1349, %v1648
        %v1719 = vadd.f32 %v1350, %v1651
        %v1720 = vadd.f32 %v1351, %v1653
        %v1721 = vadd.f32 %v1352, %v1656
        %v1722 = vadd.f32 %v1353, %v1658
        %v1723 = vadd.f32 %v1354, %v1661
        %v1724 = vadd.f32 %v1355, %v1663
        %v1725 = vadd.f32 %v1356, %v1666
        %v1726 = vadd.f32 %v1357, %v1668
        %v1727 = vadd.f32 %v1358, %v1671
        %v1728 = vadd.f32 %v1359, %v1673
        %v1729 = vadd.f32 %v1360, %v1676
        %v1730 = vadd.f32 %v1361, %v1678
        %v1731 = vadd.f32 %v1362, %v1681
        %v1732 = vadd.f32 %v1363, %v1683
        %v1733 = vadd.f32 %v1364, %v1686
        %v1734 = vadd.f32 %v1365, %v1688
        %v1735 = vadd.f32 %v1366, %v1691
        %v1736 = vadd.f32 %v1367, %v1693
        %v1737 = vadd.f32 %v1368, %v1696
        %v1738 = vadd.f32 %v1369, %v1698
        %v1739 = vadd.f32 %v1370, %v1701
        %v1740 = vadd.f32 %v1371, %v1703
        %v1741 = vld [vmem:[%s195 + $0x8] sm:$0xc]
        %s1742 = scalar_lea.vmem %s1, 10
        %v1743 = vld [vmem:[%s1742] sm:$0x3]
        %v1745 = vunpack.c.l.b16 %v1741
        %v1746 = vpack.c.b16 %v1088, %v1745
        %vm1747 = vcmask 1045504
        %v1748 = vrot.slane %v1746, 2
        %v1749 = vrot.slane %v1125, 2
        %v1750 = vsel %vm1747, %v1748, %v1749
        %v1751 = vrot.slane %v1126, 2
        %v1752 = vsel %vm1747, %v1749, %v1751
        %v1753 = vrot.slane %v1127, 2
        %v1754 = vsel %vm1747, %v1751, %v1753
        %v1755 = vrot.slane %v1128, 2
        %v1756 = vsel %vm1747, %v1753, %v1755
        %v1757 = vrot.slane %v1129, 2
        %v1758 = vsel %vm1747, %v1755, %v1757
        %v1759 = vrot.slane %v1130, 2
        %v1760 = vsel %vm1747, %v1757, %v1759
        %v1761 = vrot.slane %v1131, 2
        %v1762 = vsel %vm1747, %v1759, %v1761
        %v1763 = vrot.slane %v1132, 2
        %v1764 = vsel %vm1747, %v1761, %v1763
        %v1765 = vrot.slane %v1133, 2
        %v1766 = vsel %vm1747, %v1763, %v1765
        %v1767 = vrot.slane %v1134, 2
        %v1768 = vsel %vm1747, %v1765, %v1767
        %v1769 = vrot.slane %v1135, 2
        %v1770 = vsel %vm1747, %v1767, %v1769
        %v1771 = vrot.slane %v1136, 2
        %v1772 = vsel %vm1747, %v1769, %v1771
        %v1773 = vrot.slane %v1137, 2
        %v1774 = vsel %vm1747, %v1771, %v1773
        %v1775 = vrot.slane %v1138, 2
        %v1776 = vsel %vm1747, %v1773, %v1775
        %v1777 = vrot.slane %v1139, 2
        %v1778 = vsel %vm1747, %v1775, %v1777
        %v1779 = vrot.slane %v1140, 2
        %v1780 = vsel %vm1747, %v1777, %v1779
        %v1781 = vrot.slane %v1141, 2
        %v1782 = vsel %vm1747, %v1779, %v1781
        %v1783 = vrot.slane %v1377, 2
        %v1784 = vsel %vm1747, %v1781, %v1783
        %v1786 = vsel %vm479, %v1750, 0
        %v1789 = vsel %vm479, %v1752, 0
        %v1792 = vsel %vm479, %v1754, 0
        %v1795 = vsel %vm479, %v1756, 0
        %v1798 = vsel %vm479, %v1758, 0
        %v1801 = vsel %vm479, %v1760, 0
        %v1804 = vsel %vm479, %v1762, 0
        %v1807 = vsel %vm479, %v1764, 0
        %v1810 = vsel %vm479, %v1766, 0
        %v1813 = vsel %vm479, %v1768, 0
        %v1816 = vsel %vm479, %v1770, 0
        %v1819 = vsel %vm479, %v1772, 0
        %v1822 = vsel %vm479, %v1774, 0
        %v1825 = vsel %vm479, %v1776, 0
        %v1828 = vsel %vm479, %v1778, 0
        %v1831 = vsel %vm479, %v1780, 0
        %v1834 = vsel %vm479, %v1782, 0
        %v1837 = vsel %vm479, %v1784, 0
        %v1840 = vsel %vm534, %v1743, 0
        %1842 = vmatpush.bf16.msra.mxu0 0
        %1843 = vmatpush.bf16.msra.mxu0 0
        %1844 = vmatpush.bf16.msra.mxu0 0
        %1845 = vmatpush.bf16.msra.mxu0 0
        %1846 = vmatpush.bf16.msra.mxu0 0
        %1847 = vmatpush.bf16.msra.mxu0 0
        %1848 = vmatpush.bf16.msra.mxu0 0
        %1849 = vmatpush.bf16.msra.mxu0 %v1840
        %1850 = vmatmul.bf16.gmra.mxu0 %v1786
        %v1851 = vpop.f32.mrf.mxu0
        %v1852 = vadd.f32 0.0, %v1851
        %v1853 = vpop.f32.mrf.mxu0
        %v1854 = vadd.f32 0.0, %v1853
        %1855 = vmatmul.bf16.gmra.mxu0 %v1789
        %v1856 = vpop.f32.mrf.mxu0
        %v1857 = vadd.f32 0.0, %v1856
        %v1858 = vpop.f32.mrf.mxu0
        %v1859 = vadd.f32 0.0, %v1858
        %1860 = vmatmul.bf16.gmra.mxu0 %v1792
        %v1861 = vpop.f32.mrf.mxu0
        %v1862 = vadd.f32 0.0, %v1861
        %v1863 = vpop.f32.mrf.mxu0
        %v1864 = vadd.f32 0.0, %v1863
        %1865 = vmatmul.bf16.gmra.mxu0 %v1795
        %v1866 = vpop.f32.mrf.mxu0
        %v1867 = vadd.f32 0.0, %v1866
        %v1868 = vpop.f32.mrf.mxu0
        %v1869 = vadd.f32 0.0, %v1868
        %1870 = vmatmul.bf16.gmra.mxu0 %v1798
        %v1871 = vpop.f32.mrf.mxu0
        %v1872 = vadd.f32 0.0, %v1871
        %v1873 = vpop.f32.mrf.mxu0
        %v1874 = vadd.f32 0.0, %v1873
        %1875 = vmatmul.bf16.gmra.mxu0 %v1801
        %v1876 = vpop.f32.mrf.mxu0
        %v1877 = vadd.f32 0.0, %v1876
        %v1878 = vpop.f32.mrf.mxu0
        %v1879 = vadd.f32 0.0, %v1878
        %1880 = vmatmul.bf16.gmra.mxu0 %v1804
        %v1881 = vpop.f32.mrf.mxu0
        %v1882 = vadd.f32 0.0, %v1881
        %v1883 = vpop.f32.mrf.mxu0
        %v1884 = vadd.f32 0.0, %v1883
        %1885 = vmatmul.bf16.gmra.mxu0 %v1807
        %v1886 = vpop.f32.mrf.mxu0
        %v1887 = vadd.f32 0.0, %v1886
        %v1888 = vpop.f32.mrf.mxu0
        %v1889 = vadd.f32 0.0, %v1888
        %1890 = vmatmul.bf16.gmra.mxu0 %v1810
        %v1891 = vpop.f32.mrf.mxu0
        %v1892 = vadd.f32 0.0, %v1891
        %v1893 = vpop.f32.mrf.mxu0
        %v1894 = vadd.f32 0.0, %v1893
        %1895 = vmatmul.bf16.gmra.mxu0 %v1813
        %v1896 = vpop.f32.mrf.mxu0
        %v1897 = vadd.f32 0.0, %v1896
        %v1898 = vpop.f32.mrf.mxu0
        %v1899 = vadd.f32 0.0, %v1898
        %1900 = vmatmul.bf16.gmra.mxu0 %v1816
        %v1901 = vpop.f32.mrf.mxu0
        %v1902 = vadd.f32 0.0, %v1901
        %v1903 = vpop.f32.mrf.mxu0
        %v1904 = vadd.f32 0.0, %v1903
        %1905 = vmatmul.bf16.gmra.mxu0 %v1819
        %v1906 = vpop.f32.mrf.mxu0
        %v1907 = vadd.f32 0.0, %v1906
        %v1908 = vpop.f32.mrf.mxu0
        %v1909 = vadd.f32 0.0, %v1908
        %1910 = vmatmul.bf16.gmra.mxu0 %v1822
        %v1911 = vpop.f32.mrf.mxu0
        %v1912 = vadd.f32 0.0, %v1911
        %v1913 = vpop.f32.mrf.mxu0
        %v1914 = vadd.f32 0.0, %v1913
        %1915 = vmatmul.bf16.gmra.mxu0 %v1825
        %v1916 = vpop.f32.mrf.mxu0
        %v1917 = vadd.f32 0.0, %v1916
        %v1918 = vpop.f32.mrf.mxu0
        %v1919 = vadd.f32 0.0, %v1918
        %1920 = vmatmul.bf16.gmra.mxu0 %v1828
        %v1921 = vpop.f32.mrf.mxu0
        %v1922 = vadd.f32 0.0, %v1921
        %v1923 = vpop.f32.mrf.mxu0
        %v1924 = vadd.f32 0.0, %v1923
        %1925 = vmatmul.bf16.gmra.mxu0 %v1831
        %v1926 = vpop.f32.mrf.mxu0
        %v1927 = vadd.f32 0.0, %v1926
        %v1928 = vpop.f32.mrf.mxu0
        %v1929 = vadd.f32 0.0, %v1928
        %1930 = vmatmul.bf16.gmra.mxu0 %v1834
        %v1931 = vpop.f32.mrf.mxu0
        %v1932 = vadd.f32 0.0, %v1931
        %v1933 = vpop.f32.mrf.mxu0
        %v1934 = vadd.f32 0.0, %v1933
        %1935 = vmatmul.bf16.gmra.mxu0 %v1837
        %v1936 = vpop.f32.mrf.mxu0
        %v1937 = vadd.f32 0.0, %v1936
        %v1938 = vpop.f32.mrf.mxu0
        %v1939 = vadd.f32 0.0, %v1938
        %1940 = vdwg.mxu0
        %v1941 = vadd.f32 %v1705, %v1852
        %v1942 = vadd.f32 %v1706, %v1854
        %v1943 = vadd.f32 %v1707, %v1857
        %v1944 = vadd.f32 %v1708, %v1859
        %v1945 = vadd.f32 %v1709, %v1862
        %v1946 = vadd.f32 %v1710, %v1864
        %v1947 = vadd.f32 %v1711, %v1867
        %v1948 = vadd.f32 %v1712, %v1869
        %v1949 = vadd.f32 %v1713, %v1872
        %v1950 = vadd.f32 %v1714, %v1874
        %v1951 = vadd.f32 %v1715, %v1877
        %v1952 = vadd.f32 %v1716, %v1879
        %v1953 = vadd.f32 %v1717, %v1882
        %v1954 = vadd.f32 %v1718, %v1884
        %v1955 = vadd.f32 %v1719, %v1887
        %v1956 = vadd.f32 %v1720, %v1889
        %v1957 = vadd.f32 %v1721, %v1892
        %v1958 = vadd.f32 %v1722, %v1894
        %v1959 = vadd.f32 %v1723, %v1897
        %v1960 = vadd.f32 %v1724, %v1899
        %v1961 = vadd.f32 %v1725, %v1902
        %v1962 = vadd.f32 %v1726, %v1904
        %v1963 = vadd.f32 %v1727, %v1907
        %v1964 = vadd.f32 %v1728, %v1909
        %v1965 = vadd.f32 %v1729, %v1912
        %v1966 = vadd.f32 %v1730, %v1914
        %v1967 = vadd.f32 %v1731, %v1917
        %v1968 = vadd.f32 %v1732, %v1919
        %v1969 = vadd.f32 %v1733, %v1922
        %v1970 = vadd.f32 %v1734, %v1924
        %v1971 = vadd.f32 %v1735, %v1927
        %v1972 = vadd.f32 %v1736, %v1929
        %v1973 = vadd.f32 %v1737, %v1932
        %v1974 = vadd.f32 %v1738, %v1934
        %v1975 = vadd.f32 %v1739, %v1937
        %v1976 = vadd.f32 %v1740, %v1939
        %v1977 = vld [vmem:[%s195 + $0x10] sm:$0xc]
        %v1978 = vld [vmem:[%s195 + $0x14] sm:$0xf]
        %v1979 = vld [vmem:[%s195 + $0x18] sm:$0xf]
        %v1980 = vld [vmem:[%s195 + $0x1c] sm:$0xf]
        %v1981 = vld [vmem:[%s195 + $0x20] sm:$0xf]
        %v1982 = vld [vmem:[%s195 + $0x24] sm:$0xf]
        %v1983 = vld [vmem:[%s195 + $0x28] sm:$0xf]
        %v1984 = vld [vmem:[%s195 + $0x2c] sm:$0xf]
        %v1985 = vld [vmem:[%s195 + $0x30] sm:$0xf]
        %v1986 = vld [vmem:[%s195 + $0x34] sm:$0xf]
        %v1987 = vld [vmem:[%s195 + $0x38] sm:$0xf]
        %v1988 = vld [vmem:[%s195 + $0x3c] sm:$0xf]
        %v1989 = vld [vmem:[%s195 + $0x40] sm:$0xf]
        %v1990 = vld [vmem:[%s195 + $0x44] sm:$0xf]
        %v1991 = vld [vmem:[%s195 + $0x48] sm:$0xf]
        %v1992 = vld [vmem:[%s195 + $0x4c] sm:$0xf]
        %v1993 = vld [vmem:[%s195 + $0x50] sm:$0xf]
        %v1994 = vld [vmem:[%s195 + $0x54] sm:$0xf]
        %v1995 = vld [vmem:[%s195 + $0x58] sm:$0xf]
        %v1996 = vld [vmem:[%s195 + $0x5c] sm:$0xf]
        %v1997 = vld [vmem:[%s195 + $0x60] sm:$0xf]
        %v1998 = vld [vmem:[%s195 + $0x64] sm:$0xf]
        %v1999 = vld [vmem:[%s195 + $0x68] sm:$0xf]
        %v2000 = vld [vmem:[%s195 + $0x6c] sm:$0xf]
        %v2001 = vld [vmem:[%s195 + $0x70] sm:$0xf]
        %v2002 = vld [vmem:[%s195 + $0x74] sm:$0xf]
        %v2003 = vld [vmem:[%s195 + $0x78] sm:$0xf]
        %v2004 = vld [vmem:[%s195 + $0x7c] sm:$0xf]
        %v2005 = vld [vmem:[%s195 + $0x80] sm:$0xf]
        %v2006 = vld [vmem:[%s195 + $0x84] sm:$0xf]
        %v2007 = vld [vmem:[%s195 + $0x88] sm:$0xf]
        %v2008 = vld [vmem:[%s195 + $0x8c] sm:$0xf]
        %v2009 = vld [vmem:[%s195 + $0x90] sm:$0xf]
        %v2010 = vld [vmem:[%s195 + $0x94] sm:$0xf]
        %v2011 = vld [vmem:[%s195 + $0x98] sm:$0xf]
        %v2012 = vld [vmem:[%s195 + $0x9c] sm:$0xf]
        %v2013 = vld [vmem:[%s195 + $0xa0] sm:$0x3]
        %s2014 = scalar_lea.vmem %s1, 12
        %v2015 = vld [vmem:[%s2014] sm:$0x3]
        %v2053 = vunpack.c.l.b16 %v1977
        %v2054 = vunpack.c.l.b16 %v1978
        %v2055 = vunpack.c.l.b16 %v1979
        %v2056 = vunpack.c.l.b16 %v1980
        %v2057 = vunpack.c.l.b16 %v1981
        %v2058 = vunpack.c.l.b16 %v1982
        %v2059 = vunpack.c.l.b16 %v1983
        %v2060 = vunpack.c.l.b16 %v1984
        %v2061 = vunpack.c.l.b16 %v1985
        %v2062 = vunpack.c.l.b16 %v1986
        %v2063 = vunpack.c.l.b16 %v1987
        %v2064 = vunpack.c.l.b16 %v1988
        %v2065 = vunpack.c.l.b16 %v1989
        %v2066 = vunpack.c.l.b16 %v1990
        %v2067 = vunpack.c.l.b16 %v1991
        %v2068 = vunpack.c.l.b16 %v1992
        %v2069 = vunpack.c.l.b16 %v1993
        %v2070 = vunpack.c.l.b16 %v1994
        %v2071 = vunpack.c.l.b16 %v1995
        %v2072 = vunpack.c.l.b16 %v1996
        %v2073 = vunpack.c.l.b16 %v1997
        %v2074 = vunpack.c.l.b16 %v1998
        %v2075 = vunpack.c.l.b16 %v1999
        %v2076 = vunpack.c.l.b16 %v2000
        %v2077 = vunpack.c.l.b16 %v2001
        %v2078 = vunpack.c.l.b16 %v2002
        %v2079 = vunpack.c.l.b16 %v2003
        %v2080 = vunpack.c.l.b16 %v2004
        %v2081 = vunpack.c.l.b16 %v2005
        %v2082 = vunpack.c.l.b16 %v2006
        %v2083 = vunpack.c.l.b16 %v2007
        %v2084 = vunpack.c.l.b16 %v2008
        %v2085 = vunpack.c.l.b16 %v2009
        %v2086 = vunpack.c.l.b16 %v2010
        %v2087 = vunpack.c.l.b16 %v2011
        %v2088 = vunpack.c.l.b16 %v2012
        %v2089 = vunpack.c.l.b16 %v2013
        %v2090 = vpack.c.b16 %v2054, %v2053
        %v2091 = vpack.c.b16 %v2056, %v2055
        %v2092 = vpack.c.b16 %v2058, %v2057
        %v2093 = vpack.c.b16 %v2060, %v2059
        %v2094 = vpack.c.b16 %v2062, %v2061
        %v2095 = vpack.c.b16 %v2064, %v2063
        %v2096 = vpack.c.b16 %v2066, %v2065
        %v2097 = vpack.c.b16 %v2068, %v2067
        %v2098 = vpack.c.b16 %v2070, %v2069
        %v2099 = vpack.c.b16 %v2072, %v2071
        %v2100 = vpack.c.b16 %v2074, %v2073
        %v2101 = vpack.c.b16 %v2076, %v2075
        %v2102 = vpack.c.b16 %v2078, %v2077
        %v2103 = vpack.c.b16 %v2080, %v2079
        %v2104 = vpack.c.b16 %v2082, %v2081
        %v2105 = vpack.c.b16 %v2084, %v2083
        %v2106 = vpack.c.b16 %v2086, %v2085
        %v2107 = vpack.c.b16 %v2088, %v2087
        %v2108 = vpack.c.b16 %v2089, %v2089
        %v2109 = vrot.slane %v2090, 2
        %v2110 = vrot.slane %v2091, 2
        %v2111 = vsel %vm1747, %v2109, %v2110
        %v2112 = vrot.slane %v2092, 2
        %v2113 = vsel %vm1747, %v2110, %v2112
        %v2114 = vrot.slane %v2093, 2
        %v2115 = vsel %vm1747, %v2112, %v2114
        %v2116 = vrot.slane %v2094, 2
        %v2117 = vsel %vm1747, %v2114, %v2116
        %v2118 = vrot.slane %v2095, 2
        %v2119 = vsel %vm1747, %v2116, %v2118
        %v2120 = vrot.slane %v2096, 2
        %v2121 = vsel %vm1747, %v2118, %v2120
        %v2122 = vrot.slane %v2097, 2
        %v2123 = vsel %vm1747, %v2120, %v2122
        %v2124 = vrot.slane %v2098, 2
        %v2125 = vsel %vm1747, %v2122, %v2124
        %v2126 = vrot.slane %v2099, 2
        %v2127 = vsel %vm1747, %v2124, %v2126
        %v2128 = vrot.slane %v2100, 2
        %v2129 = vsel %vm1747, %v2126, %v2128
        %v2130 = vrot.slane %v2101, 2
        %v2131 = vsel %vm1747, %v2128, %v2130
        %v2132 = vrot.slane %v2102, 2
        %v2133 = vsel %vm1747, %v2130, %v2132
        %v2134 = vrot.slane %v2103, 2
        %v2135 = vsel %vm1747, %v2132, %v2134
        %v2136 = vrot.slane %v2104, 2
        %v2137 = vsel %vm1747, %v2134, %v2136
        %v2138 = vrot.slane %v2105, 2
        %v2139 = vsel %vm1747, %v2136, %v2138
        %v2140 = vrot.slane %v2106, 2
        %v2141 = vsel %vm1747, %v2138, %v2140
        %v2142 = vrot.slane %v2107, 2
        %v2143 = vsel %vm1747, %v2140, %v2142
        %v2144 = vrot.slane %v2108, 2
        %v2145 = vsel %vm1747, %v2142, %v2144
        %v2147 = vsel %vm479, %v2111, 0
        %v2150 = vsel %vm479, %v2113, 0
        %v2153 = vsel %vm479, %v2115, 0
        %v2156 = vsel %vm479, %v2117, 0
        %v2159 = vsel %vm479, %v2119, 0
        %v2162 = vsel %vm479, %v2121, 0
        %v2165 = vsel %vm479, %v2123, 0
        %v2168 = vsel %vm479, %v2125, 0
        %v2171 = vsel %vm479, %v2127, 0
        %v2174 = vsel %vm479, %v2129, 0
        %v2177 = vsel %vm479, %v2131, 0
        %v2180 = vsel %vm479, %v2133, 0
        %v2183 = vsel %vm479, %v2135, 0
        %v2186 = vsel %vm479, %v2137, 0
        %v2189 = vsel %vm479, %v2139, 0
        %v2192 = vsel %vm479, %v2141, 0
        %v2195 = vsel %vm479, %v2143, 0
        %v2198 = vsel %vm479, %v2145, 0
        %v2201 = vsel %vm534, %v2015, 0
        %2203 = vmatpush.bf16.msra.mxu0 0
        %2204 = vmatpush.bf16.msra.mxu0 0
        %2205 = vmatpush.bf16.msra.mxu0 0
        %2206 = vmatpush.bf16.msra.mxu0 0
        %2207 = vmatpush.bf16.msra.mxu0 0
        %2208 = vmatpush.bf16.msra.mxu0 0
        %2209 = vmatpush.bf16.msra.mxu0 0
        %2210 = vmatpush.bf16.msra.mxu0 %v2201
        %2211 = vmatmul.bf16.gmra.mxu0 %v2147
        %v2212 = vpop.f32.mrf.mxu0
        %v2213 = vadd.f32 0.0, %v2212
        %v2214 = vpop.f32.mrf.mxu0
        %v2215 = vadd.f32 0.0, %v2214
        %2216 = vmatmul.bf16.gmra.mxu0 %v2150
        %v2217 = vpop.f32.mrf.mxu0
        %v2218 = vadd.f32 0.0, %v2217
        %v2219 = vpop.f32.mrf.mxu0
        %v2220 = vadd.f32 0.0, %v2219
        %2221 = vmatmul.bf16.gmra.mxu0 %v2153
        %v2222 = vpop.f32.mrf.mxu0
        %v2223 = vadd.f32 0.0, %v2222
        %v2224 = vpop.f32.mrf.mxu0
        %v2225 = vadd.f32 0.0, %v2224
        %2226 = vmatmul.bf16.gmra.mxu0 %v2156
        %v2227 = vpop.f32.mrf.mxu0
        %v2228 = vadd.f32 0.0, %v2227
        %v2229 = vpop.f32.mrf.mxu0
        %v2230 = vadd.f32 0.0, %v2229
        %2231 = vmatmul.bf16.gmra.mxu0 %v2159
        %v2232 = vpop.f32.mrf.mxu0
        %v2233 = vadd.f32 0.0, %v2232
        %v2234 = vpop.f32.mrf.mxu0
        %v2235 = vadd.f32 0.0, %v2234
        %2236 = vmatmul.bf16.gmra.mxu0 %v2162
        %v2237 = vpop.f32.mrf.mxu0
        %v2238 = vadd.f32 0.0, %v2237
        %v2239 = vpop.f32.mrf.mxu0
        %v2240 = vadd.f32 0.0, %v2239
        %2241 = vmatmul.bf16.gmra.mxu0 %v2165
        %v2242 = vpop.f32.mrf.mxu0
        %v2243 = vadd.f32 0.0, %v2242
        %v2244 = vpop.f32.mrf.mxu0
        %v2245 = vadd.f32 0.0, %v2244
        %2246 = vmatmul.bf16.gmra.mxu0 %v2168
        %v2247 = vpop.f32.mrf.mxu0
        %v2248 = vadd.f32 0.0, %v2247
        %v2249 = vpop.f32.mrf.mxu0
        %v2250 = vadd.f32 0.0, %v2249
        %2251 = vmatmul.bf16.gmra.mxu0 %v2171
        %v2252 = vpop.f32.mrf.mxu0
        %v2253 = vadd.f32 0.0, %v2252
        %v2254 = vpop.f32.mrf.mxu0
        %v2255 = vadd.f32 0.0, %v2254
        %2256 = vmatmul.bf16.gmra.mxu0 %v2174
        %v2257 = vpop.f32.mrf.mxu0
        %v2258 = vadd.f32 0.0, %v2257
        %v2259 = vpop.f32.mrf.mxu0
        %v2260 = vadd.f32 0.0, %v2259
        %2261 = vmatmul.bf16.gmra.mxu0 %v2177
        %v2262 = vpop.f32.mrf.mxu0
        %v2263 = vadd.f32 0.0, %v2262
        %v2264 = vpop.f32.mrf.mxu0
        %v2265 = vadd.f32 0.0, %v2264
        %2266 = vmatmul.bf16.gmra.mxu0 %v2180
        %v2267 = vpop.f32.mrf.mxu0
        %v2268 = vadd.f32 0.0, %v2267
        %v2269 = vpop.f32.mrf.mxu0
        %v2270 = vadd.f32 0.0, %v2269
        %2271 = vmatmul.bf16.gmra.mxu0 %v2183
        %v2272 = vpop.f32.mrf.mxu0
        %v2273 = vadd.f32 0.0, %v2272
        %v2274 = vpop.f32.mrf.mxu0
        %v2275 = vadd.f32 0.0, %v2274
        %2276 = vmatmul.bf16.gmra.mxu0 %v2186
        %v2277 = vpop.f32.mrf.mxu0
        %v2278 = vadd.f32 0.0, %v2277
        %v2279 = vpop.f32.mrf.mxu0
        %v2280 = vadd.f32 0.0, %v2279
        %2281 = vmatmul.bf16.gmra.mxu0 %v2189
        %v2282 = vpop.f32.mrf.mxu0
        %v2283 = vadd.f32 0.0, %v2282
        %v2284 = vpop.f32.mrf.mxu0
        %v2285 = vadd.f32 0.0, %v2284
        %2286 = vmatmul.bf16.gmra.mxu0 %v2192
        %v2287 = vpop.f32.mrf.mxu0
        %v2288 = vadd.f32 0.0, %v2287
        %v2289 = vpop.f32.mrf.mxu0
        %v2290 = vadd.f32 0.0, %v2289
        %2291 = vmatmul.bf16.gmra.mxu0 %v2195
        %v2292 = vpop.f32.mrf.mxu0
        %v2293 = vadd.f32 0.0, %v2292
        %v2294 = vpop.f32.mrf.mxu0
        %v2295 = vadd.f32 0.0, %v2294
        %2296 = vmatmul.bf16.gmra.mxu0 %v2198
        %v2297 = vpop.f32.mrf.mxu0
        %v2298 = vadd.f32 0.0, %v2297
        %v2299 = vpop.f32.mrf.mxu0
        %v2300 = vadd.f32 0.0, %v2299
        %2301 = vdwg.mxu0
        %v2302 = vadd.f32 %v1941, %v2213
        %v2303 = vadd.f32 %v1942, %v2215
        %v2304 = vadd.f32 %v1943, %v2218
        %v2305 = vadd.f32 %v1944, %v2220
        %v2306 = vadd.f32 %v1945, %v2223
        %v2307 = vadd.f32 %v1946, %v2225
        %v2308 = vadd.f32 %v1947, %v2228
        %v2309 = vadd.f32 %v1948, %v2230
        %v2310 = vadd.f32 %v1949, %v2233
        %v2311 = vadd.f32 %v1950, %v2235
        %v2312 = vadd.f32 %v1951, %v2238
        %v2313 = vadd.f32 %v1952, %v2240
        %v2314 = vadd.f32 %v1953, %v2243
        %v2315 = vadd.f32 %v1954, %v2245
        %v2316 = vadd.f32 %v1955, %v2248
        %v2317 = vadd.f32 %v1956, %v2250
        %v2318 = vadd.f32 %v1957, %v2253
        %v2319 = vadd.f32 %v1958, %v2255
        %v2320 = vadd.f32 %v1959, %v2258
        %v2321 = vadd.f32 %v1960, %v2260
        %v2322 = vadd.f32 %v1961, %v2263
        %v2323 = vadd.f32 %v1962, %v2265
        %v2324 = vadd.f32 %v1963, %v2268
        %v2325 = vadd.f32 %v1964, %v2270
        %v2326 = vadd.f32 %v1965, %v2273
        %v2327 = vadd.f32 %v1966, %v2275
        %v2328 = vadd.f32 %v1967, %v2278
        %v2329 = vadd.f32 %v1968, %v2280
        %v2330 = vadd.f32 %v1969, %v2283
        %v2331 = vadd.f32 %v1970, %v2285
        %v2332 = vadd.f32 %v1971, %v2288
        %v2333 = vadd.f32 %v1972, %v2290
        %v2334 = vadd.f32 %v1973, %v2293
        %v2335 = vadd.f32 %v1974, %v2295
        %v2336 = vadd.f32 %v1975, %v2298
        %v2337 = vadd.f32 %v1976, %v2300
        %v2338 = vld [vmem:[%s195 + $0xa0] sm:$0x7]
        %s2339 = scalar_lea.vmem %s1, 14
        %v2340 = vld [vmem:[%s2339] sm:$0x3]
        %v2342 = vunpack.c.l.b16 %v2338
        %v2343 = vpack.c.b16 %v2342, %v2342
        %vm2344 = vsmask.f32 5376
        %v2346 = vshrl.u32 %v2090, 16
        %v2348 = vrot.slane %v2346, 2
        %v2349 = vshll.u32 %v2090, 16
        %v2351 = vrot.slane %v2349, 3
        %v2352 = vor.u32 %v2348, %v2351
        %v2354 = vshrl.u32 %v2091, 16
        %v2356 = vrot.slane %v2354, 2
        %v2357 = vshll.u32 %v2091, 16
        %v2359 = vrot.slane %v2357, 3
        %v2360 = vor.u32 %v2356, %v2359
        %v2361 = vsel %vm2344, %v2352, %v2360
        %v2363 = vshrl.u32 %v2092, 16
        %v2365 = vrot.slane %v2363, 2
        %v2366 = vshll.u32 %v2092, 16
        %v2368 = vrot.slane %v2366, 3
        %v2369 = vor.u32 %v2365, %v2368
        %v2370 = vsel %vm2344, %v2360, %v2369
        %v2372 = vshrl.u32 %v2093, 16
        %v2374 = vrot.slane %v2372, 2
        %v2375 = vshll.u32 %v2093, 16
        %v2377 = vrot.slane %v2375, 3
        %v2378 = vor.u32 %v2374, %v2377
        %v2379 = vsel %vm2344, %v2369, %v2378
        %v2381 = vshrl.u32 %v2094, 16
        %v2383 = vrot.slane %v2381, 2
        %v2384 = vshll.u32 %v2094, 16
        %v2386 = vrot.slane %v2384, 3
        %v2387 = vor.u32 %v2383, %v2386
        %v2388 = vsel %vm2344, %v2378, %v2387
        %v2390 = vshrl.u32 %v2095, 16
        %v2392 = vrot.slane %v2390, 2
        %v2393 = vshll.u32 %v2095, 16
        %v2395 = vrot.slane %v2393, 3
        %v2396 = vor.u32 %v2392, %v2395
        %v2397 = vsel %vm2344, %v2387, %v2396
        %v2399 = vshrl.u32 %v2096, 16
        %v2401 = vrot.slane %v2399, 2
        %v2402 = vshll.u32 %v2096, 16
        %v2404 = vrot.slane %v2402, 3
        %v2405 = vor.u32 %v2401, %v2404
        %v2406 = vsel %vm2344, %v2396, %v2405
        %v2408 = vshrl.u32 %v2097, 16
        %v2410 = vrot.slane %v2408, 2
        %v2411 = vshll.u32 %v2097, 16
        %v2413 = vrot.slane %v2411, 3
        %v2414 = vor.u32 %v2410, %v2413
        %v2415 = vsel %vm2344, %v2405, %v2414
        %v2417 = vshrl.u32 %v2098, 16
        %v2419 = vrot.slane %v2417, 2
        %v2420 = vshll.u32 %v2098, 16
        %v2422 = vrot.slane %v2420, 3
        %v2423 = vor.u32 %v2419, %v2422
        %v2424 = vsel %vm2344, %v2414, %v2423
        %v2426 = vshrl.u32 %v2099, 16
        %v2428 = vrot.slane %v2426, 2
        %v2429 = vshll.u32 %v2099, 16
        %v2431 = vrot.slane %v2429, 3
        %v2432 = vor.u32 %v2428, %v2431
        %v2433 = vsel %vm2344, %v2423, %v2432
        %v2435 = vshrl.u32 %v2100, 16
        %v2437 = vrot.slane %v2435, 2
        %v2438 = vshll.u32 %v2100, 16
        %v2440 = vrot.slane %v2438, 3
        %v2441 = vor.u32 %v2437, %v2440
        %v2442 = vsel %vm2344, %v2432, %v2441
        %v2444 = vshrl.u32 %v2101, 16
        %v2446 = vrot.slane %v2444, 2
        %v2447 = vshll.u32 %v2101, 16
        %v2449 = vrot.slane %v2447, 3
        %v2450 = vor.u32 %v2446, %v2449
        %v2451 = vsel %vm2344, %v2441, %v2450
        %v2453 = vshrl.u32 %v2102, 16
        %v2455 = vrot.slane %v2453, 2
        %v2456 = vshll.u32 %v2102, 16
        %v2458 = vrot.slane %v2456, 3
        %v2459 = vor.u32 %v2455, %v2458
        %v2460 = vsel %vm2344, %v2450, %v2459
        %v2462 = vshrl.u32 %v2103, 16
        %v2464 = vrot.slane %v2462, 2
        %v2465 = vshll.u32 %v2103, 16
        %v2467 = vrot.slane %v2465, 3
        %v2468 = vor.u32 %v2464, %v2467
        %v2469 = vsel %vm2344, %v2459, %v2468
        %v2471 = vshrl.u32 %v2104, 16
        %v2473 = vrot.slane %v2471, 2
        %v2474 = vshll.u32 %v2104, 16
        %v2476 = vrot.slane %v2474, 3
        %v2477 = vor.u32 %v2473, %v2476
        %v2478 = vsel %vm2344, %v2468, %v2477
        %v2480 = vshrl.u32 %v2105, 16
        %v2482 = vrot.slane %v2480, 2
        %v2483 = vshll.u32 %v2105, 16
        %v2485 = vrot.slane %v2483, 3
        %v2486 = vor.u32 %v2482, %v2485
        %v2487 = vsel %vm2344, %v2477, %v2486
        %v2489 = vshrl.u32 %v2106, 16
        %v2491 = vrot.slane %v2489, 2
        %v2492 = vshll.u32 %v2106, 16
        %v2494 = vrot.slane %v2492, 3
        %v2495 = vor.u32 %v2491, %v2494
        %v2496 = vsel %vm2344, %v2486, %v2495
        %v2498 = vshrl.u32 %v2107, 16
        %v2500 = vrot.slane %v2498, 2
        %v2501 = vshll.u32 %v2107, 16
        %v2503 = vrot.slane %v2501, 3
        %v2504 = vor.u32 %v2500, %v2503
        %v2505 = vsel %vm2344, %v2495, %v2504
        %v2507 = vshrl.u32 %v2343, 16
        %v2509 = vrot.slane %v2507, 2
        %v2510 = vshll.u32 %v2343, 16
        %v2512 = vrot.slane %v2510, 3
        %v2513 = vor.u32 %v2509, %v2512
        %v2514 = vsel %vm2344, %v2504, %v2513
        %v2516 = vsel %vm479, %v2361, 0
        %v2519 = vsel %vm479, %v2370, 0
        %v2522 = vsel %vm479, %v2379, 0
        %v2525 = vsel %vm479, %v2388, 0
        %v2528 = vsel %vm479, %v2397, 0
        %v2531 = vsel %vm479, %v2406, 0
        %v2534 = vsel %vm479, %v2415, 0
        %v2537 = vsel %vm479, %v2424, 0
        %v2540 = vsel %vm479, %v2433, 0
        %v2543 = vsel %vm479, %v2442, 0
        %v2546 = vsel %vm479, %v2451, 0
        %v2549 = vsel %vm479, %v2460, 0
        %v2552 = vsel %vm479, %v2469, 0
        %v2555 = vsel %vm479, %v2478, 0
        %v2558 = vsel %vm479, %v2487, 0
        %v2561 = vsel %vm479, %v2496, 0
        %v2564 = vsel %vm479, %v2505, 0
        %v2567 = vsel %vm479, %v2514, 0
        %v2570 = vsel %vm534, %v2340, 0
        %2572 = vmatpush.bf16.msra.mxu0 0
        %2573 = vmatpush.bf16.msra.mxu0 0
        %2574 = vmatpush.bf16.msra.mxu0 0
        %2575 = vmatpush.bf16.msra.mxu0 0
        %2576 = vmatpush.bf16.msra.mxu0 0
        %2577 = vmatpush.bf16.msra.mxu0 0
        %2578 = vmatpush.bf16.msra.mxu0 0
        %2579 = vmatpush.bf16.msra.mxu0 %v2570
        %2580 = vmatmul.bf16.gmra.mxu0 %v2516
        %v2581 = vpop.f32.mrf.mxu0
        %v2582 = vadd.f32 0.0, %v2581
        %v2583 = vpop.f32.mrf.mxu0
        %v2584 = vadd.f32 0.0, %v2583
        %2585 = vmatmul.bf16.gmra.mxu0 %v2519
        %v2586 = vpop.f32.mrf.mxu0
        %v2587 = vadd.f32 0.0, %v2586
        %v2588 = vpop.f32.mrf.mxu0
        %v2589 = vadd.f32 0.0, %v2588
        %2590 = vmatmul.bf16.gmra.mxu0 %v2522
        %v2591 = vpop.f32.mrf.mxu0
        %v2592 = vadd.f32 0.0, %v2591
        %v2593 = vpop.f32.mrf.mxu0
        %v2594 = vadd.f32 0.0, %v2593
        %2595 = vmatmul.bf16.gmra.mxu0 %v2525
        %v2596 = vpop.f32.mrf.mxu0
        %v2597 = vadd.f32 0.0, %v2596
        %v2598 = vpop.f32.mrf.mxu0
        %v2599 = vadd.f32 0.0, %v2598
        %2600 = vmatmul.bf16.gmra.mxu0 %v2528
        %v2601 = vpop.f32.mrf.mxu0
        %v2602 = vadd.f32 0.0, %v2601
        %v2603 = vpop.f32.mrf.mxu0
        %v2604 = vadd.f32 0.0, %v2603
        %2605 = vmatmul.bf16.gmra.mxu0 %v2531
        %v2606 = vpop.f32.mrf.mxu0
        %v2607 = vadd.f32 0.0, %v2606
        %v2608 = vpop.f32.mrf.mxu0
        %v2609 = vadd.f32 0.0, %v2608
        %2610 = vmatmul.bf16.gmra.mxu0 %v2534
        %v2611 = vpop.f32.mrf.mxu0
        %v2612 = vadd.f32 0.0, %v2611
        %v2613 = vpop.f32.mrf.mxu0
        %v2614 = vadd.f32 0.0, %v2613
        %2615 = vmatmul.bf16.gmra.mxu0 %v2537
        %v2616 = vpop.f32.mrf.mxu0
        %v2617 = vadd.f32 0.0, %v2616
        %v2618 = vpop.f32.mrf.mxu0
        %v2619 = vadd.f32 0.0, %v2618
        %2620 = vmatmul.bf16.gmra.mxu0 %v2540
        %v2621 = vpop.f32.mrf.mxu0
        %v2622 = vadd.f32 0.0, %v2621
        %v2623 = vpop.f32.mrf.mxu0
        %v2624 = vadd.f32 0.0, %v2623
        %2625 = vmatmul.bf16.gmra.mxu0 %v2543
        %v2626 = vpop.f32.mrf.mxu0
        %v2627 = vadd.f32 0.0, %v2626
        %v2628 = vpop.f32.mrf.mxu0
        %v2629 = vadd.f32 0.0, %v2628
        %2630 = vmatmul.bf16.gmra.mxu0 %v2546
        %v2631 = vpop.f32.mrf.mxu0
        %v2632 = vadd.f32 0.0, %v2631
        %v2633 = vpop.f32.mrf.mxu0
        %v2634 = vadd.f32 0.0, %v2633
        %2635 = vmatmul.bf16.gmra.mxu0 %v2549
        %v2636 = vpop.f32.mrf.mxu0
        %v2637 = vadd.f32 0.0, %v2636
        %v2638 = vpop.f32.mrf.mxu0
        %v2639 = vadd.f32 0.0, %v2638
        %2640 = vmatmul.bf16.gmra.mxu0 %v2552
        %v2641 = vpop.f32.mrf.mxu0
        %v2642 = vadd.f32 0.0, %v2641
        %v2643 = vpop.f32.mrf.mxu0
        %v2644 = vadd.f32 0.0, %v2643
        %2645 = vmatmul.bf16.gmra.mxu0 %v2555
        %v2646 = vpop.f32.mrf.mxu0
        %v2647 = vadd.f32 0.0, %v2646
        %v2648 = vpop.f32.mrf.mxu0
        %v2649 = vadd.f32 0.0, %v2648
        %2650 = vmatmul.bf16.gmra.mxu0 %v2558
        %v2651 = vpop.f32.mrf.mxu0
        %v2652 = vadd.f32 0.0, %v2651
        %v2653 = vpop.f32.mrf.mxu0
        %v2654 = vadd.f32 0.0, %v2653
        %2655 = vmatmul.bf16.gmra.mxu0 %v2561
        %v2656 = vpop.f32.mrf.mxu0
        %v2657 = vadd.f32 0.0, %v2656
        %v2658 = vpop.f32.mrf.mxu0
        %v2659 = vadd.f32 0.0, %v2658
        %2660 = vmatmul.bf16.gmra.mxu0 %v2564
        %v2661 = vpop.f32.mrf.mxu0
        %v2662 = vadd.f32 0.0, %v2661
        %v2663 = vpop.f32.mrf.mxu0
        %v2664 = vadd.f32 0.0, %v2663
        %2665 = vmatmul.bf16.gmra.mxu0 %v2567
        %v2666 = vpop.f32.mrf.mxu0
        %v2667 = vadd.f32 0.0, %v2666
        %v2668 = vpop.f32.mrf.mxu0
        %v2669 = vadd.f32 0.0, %v2668
        %2670 = vdwg.mxu0
        %v2671 = vadd.f32 %v2302, %v2582
        %v2672 = vadd.f32 %v2303, %v2584
        %v2673 = vadd.f32 %v2304, %v2587
        %v2674 = vadd.f32 %v2305, %v2589
        %v2675 = vadd.f32 %v2306, %v2592
        %v2676 = vadd.f32 %v2307, %v2594
        %v2677 = vadd.f32 %v2308, %v2597
        %v2678 = vadd.f32 %v2309, %v2599
        %v2679 = vadd.f32 %v2310, %v2602
        %v2680 = vadd.f32 %v2311, %v2604
        %v2681 = vadd.f32 %v2312, %v2607
        %v2682 = vadd.f32 %v2313, %v2609
        %v2683 = vadd.f32 %v2314, %v2612
        %v2684 = vadd.f32 %v2315, %v2614
        %v2685 = vadd.f32 %v2316, %v2617
        %v2686 = vadd.f32 %v2317, %v2619
        %v2687 = vadd.f32 %v2318, %v2622
        %v2688 = vadd.f32 %v2319, %v2624
        %v2689 = vadd.f32 %v2320, %v2627
        %v2690 = vadd.f32 %v2321, %v2629
        %v2691 = vadd.f32 %v2322, %v2632
        %v2692 = vadd.f32 %v2323, %v2634
        %v2693 = vadd.f32 %v2324, %v2637
        %v2694 = vadd.f32 %v2325, %v2639
        %v2695 = vadd.f32 %v2326, %v2642
        %v2696 = vadd.f32 %v2327, %v2644
        %v2697 = vadd.f32 %v2328, %v2647
        %v2698 = vadd.f32 %v2329, %v2649
        %v2699 = vadd.f32 %v2330, %v2652
        %v2700 = vadd.f32 %v2331, %v2654
        %v2701 = vadd.f32 %v2332, %v2657
        %v2702 = vadd.f32 %v2333, %v2659
        %v2703 = vadd.f32 %v2334, %v2662
        %v2704 = vadd.f32 %v2335, %v2664
        %v2705 = vadd.f32 %v2336, %v2667
        %v2706 = vadd.f32 %v2337, %v2669
        %v2707 = vld [vmem:[%s195 + $0x10] sm:$0x8]
        %s2708 = scalar_lea.vmem %s1, 16
        %v2709 = vld [vmem:[%s2708] sm:$0x3]
        %v2711 = vunpack.c.l.b16 %v2707
        %v2712 = vpack.c.b16 %v2054, %v2711
        %vm2713 = vcmask 1044480
        %v2714 = vrot.slane %v2712, 3
        %v2715 = vrot.slane %v2091, 3
        %v2716 = vsel %vm2713, %v2714, %v2715
        %v2717 = vrot.slane %v2092, 3
        %v2718 = vsel %vm2713, %v2715, %v2717
        %v2719 = vrot.slane %v2093, 3
        %v2720 = vsel %vm2713, %v2717, %v2719
        %v2721 = vrot.slane %v2094, 3
        %v2722 = vsel %vm2713, %v2719, %v2721
        %v2723 = vrot.slane %v2095, 3
        %v2724 = vsel %vm2713, %v2721, %v2723
        %v2725 = vrot.slane %v2096, 3
        %v2726 = vsel %vm2713, %v2723, %v2725
        %v2727 = vrot.slane %v2097, 3
        %v2728 = vsel %vm2713, %v2725, %v2727
        %v2729 = vrot.slane %v2098, 3
        %v2730 = vsel %vm2713, %v2727, %v2729
        %v2731 = vrot.slane %v2099, 3
        %v2732 = vsel %vm2713, %v2729, %v2731
        %v2733 = vrot.slane %v2100, 3
        %v2734 = vsel %vm2713, %v2731, %v2733
        %v2735 = vrot.slane %v2101, 3
        %v2736 = vsel %vm2713, %v2733, %v2735
        %v2737 = vrot.slane %v2102, 3
        %v2738 = vsel %vm2713, %v2735, %v2737
        %v2739 = vrot.slane %v2103, 3
        %v2740 = vsel %vm2713, %v2737, %v2739
        %v2741 = vrot.slane %v2104, 3
        %v2742 = vsel %vm2713, %v2739, %v2741
        %v2743 = vrot.slane %v2105, 3
        %v2744 = vsel %vm2713, %v2741, %v2743
        %v2745 = vrot.slane %v2106, 3
        %v2746 = vsel %vm2713, %v2743, %v2745
        %v2747 = vrot.slane %v2107, 3
        %v2748 = vsel %vm2713, %v2745, %v2747
        %v2749 = vrot.slane %v2343, 3
        %v2750 = vsel %vm2713, %v2747, %v2749
        %v2752 = vsel %vm479, %v2716, 0
        %v2755 = vsel %vm479, %v2718, 0
        %v2758 = vsel %vm479, %v2720, 0
        %v2761 = vsel %vm479, %v2722, 0
        %v2764 = vsel %vm479, %v2724, 0
        %v2767 = vsel %vm479, %v2726, 0
        %v2770 = vsel %vm479, %v2728, 0
        %v2773 = vsel %vm479, %v2730, 0
        %v2776 = vsel %vm479, %v2732, 0
        %v2779 = vsel %vm479, %v2734, 0
        %v2782 = vsel %vm479, %v2736, 0
        %v2785 = vsel %vm479, %v2738, 0
        %v2788 = vsel %vm479, %v2740, 0
        %v2791 = vsel %vm479, %v2742, 0
        %v2794 = vsel %vm479, %v2744, 0
        %v2797 = vsel %vm479, %v2746, 0
        %v2800 = vsel %vm479, %v2748, 0
        %v2803 = vsel %vm479, %v2750, 0
        %v2806 = vsel %vm534, %v2709, 0
        %2808 = vmatpush.bf16.msra.mxu0 0
        %2809 = vmatpush.bf16.msra.mxu0 0
        %2810 = vmatpush.bf16.msra.mxu0 0
        %2811 = vmatpush.bf16.msra.mxu0 0
        %2812 = vmatpush.bf16.msra.mxu0 0
        %2813 = vmatpush.bf16.msra.mxu0 0
        %2814 = vmatpush.bf16.msra.mxu0 0
        %2815 = vmatpush.bf16.msra.mxu0 %v2806
        %2816 = vmatmul.bf16.gmra.mxu0 %v2752
        %v2817 = vpop.f32.mrf.mxu0
        %v2818 = vadd.f32 0.0, %v2817
        %v2819 = vpop.f32.mrf.mxu0
        %v2820 = vadd.f32 0.0, %v2819
        %2821 = vmatmul.bf16.gmra.mxu0 %v2755
        %v2822 = vpop.f32.mrf.mxu0
        %v2823 = vadd.f32 0.0, %v2822
        %v2824 = vpop.f32.mrf.mxu0
        %v2825 = vadd.f32 0.0, %v2824
        %2826 = vmatmul.bf16.gmra.mxu0 %v2758
        %v2827 = vpop.f32.mrf.mxu0
        %v2828 = vadd.f32 0.0, %v2827
        %v2829 = vpop.f32.mrf.mxu0
        %v2830 = vadd.f32 0.0, %v2829
        %2831 = vmatmul.bf16.gmra.mxu0 %v2761
        %v2832 = vpop.f32.mrf.mxu0
        %v2833 = vadd.f32 0.0, %v2832
        %v2834 = vpop.f32.mrf.mxu0
        %v2835 = vadd.f32 0.0, %v2834
        %2836 = vmatmul.bf16.gmra.mxu0 %v2764
        %v2837 = vpop.f32.mrf.mxu0
        %v2838 = vadd.f32 0.0, %v2837
        %v2839 = vpop.f32.mrf.mxu0
        %v2840 = vadd.f32 0.0, %v2839
        %2841 = vmatmul.bf16.gmra.mxu0 %v2767
        %v2842 = vpop.f32.mrf.mxu0
        %v2843 = vadd.f32 0.0, %v2842
        %v2844 = vpop.f32.mrf.mxu0
        %v2845 = vadd.f32 0.0, %v2844
        %2846 = vmatmul.bf16.gmra.mxu0 %v2770
        %v2847 = vpop.f32.mrf.mxu0
        %v2848 = vadd.f32 0.0, %v2847
        %v2849 = vpop.f32.mrf.mxu0
        %v2850 = vadd.f32 0.0, %v2849
        %2851 = vmatmul.bf16.gmra.mxu0 %v2773
        %v2852 = vpop.f32.mrf.mxu0
        %v2853 = vadd.f32 0.0, %v2852
        %v2854 = vpop.f32.mrf.mxu0
        %v2855 = vadd.f32 0.0, %v2854
        %2856 = vmatmul.bf16.gmra.mxu0 %v2776
        %v2857 = vpop.f32.mrf.mxu0
        %v2858 = vadd.f32 0.0, %v2857
        %v2859 = vpop.f32.mrf.mxu0
        %v2860 = vadd.f32 0.0, %v2859
        %2861 = vmatmul.bf16.gmra.mxu0 %v2779
        %v2862 = vpop.f32.mrf.mxu0
        %v2863 = vadd.f32 0.0, %v2862
        %v2864 = vpop.f32.mrf.mxu0
        %v2865 = vadd.f32 0.0, %v2864
        %2866 = vmatmul.bf16.gmra.mxu0 %v2782
        %v2867 = vpop.f32.mrf.mxu0
        %v2868 = vadd.f32 0.0, %v2867
        %v2869 = vpop.f32.mrf.mxu0
        %v2870 = vadd.f32 0.0, %v2869
        %2871 = vmatmul.bf16.gmra.mxu0 %v2785
        %v2872 = vpop.f32.mrf.mxu0
        %v2873 = vadd.f32 0.0, %v2872
        %v2874 = vpop.f32.mrf.mxu0
        %v2875 = vadd.f32 0.0, %v2874
        %2876 = vmatmul.bf16.gmra.mxu0 %v2788
        %v2877 = vpop.f32.mrf.mxu0
        %v2878 = vadd.f32 0.0, %v2877
        %v2879 = vpop.f32.mrf.mxu0
        %v2880 = vadd.f32 0.0, %v2879
        %2881 = vmatmul.bf16.gmra.mxu0 %v2791
        %v2882 = vpop.f32.mrf.mxu0
        %v2883 = vadd.f32 0.0, %v2882
        %v2884 = vpop.f32.mrf.mxu0
        %v2885 = vadd.f32 0.0, %v2884
        %2886 = vmatmul.bf16.gmra.mxu0 %v2794
        %v2887 = vpop.f32.mrf.mxu0
        %v2888 = vadd.f32 0.0, %v2887
        %v2889 = vpop.f32.mrf.mxu0
        %v2890 = vadd.f32 0.0, %v2889
        %2891 = vmatmul.bf16.gmra.mxu0 %v2797
        %v2892 = vpop.f32.mrf.mxu0
        %v2893 = vadd.f32 0.0, %v2892
        %v2894 = vpop.f32.mrf.mxu0
        %v2895 = vadd.f32 0.0, %v2894
        %2896 = vmatmul.bf16.gmra.mxu0 %v2800
        %v2897 = vpop.f32.mrf.mxu0
        %v2898 = vadd.f32 0.0, %v2897
        %v2899 = vpop.f32.mrf.mxu0
        %v2900 = vadd.f32 0.0, %v2899
        %2901 = vmatmul.bf16.gmra.mxu0 %v2803
        %v2902 = vpop.f32.mrf.mxu0
        %v2903 = vadd.f32 0.0, %v2902
        %v2904 = vpop.f32.mrf.mxu0
        %v2905 = vadd.f32 0.0, %v2904
        %2906 = vdwg.mxu0
        %v2907 = vadd.f32 %v2671, %v2818
        %v2908 = vadd.f32 %v2672, %v2820
        %v2909 = vadd.f32 %v2673, %v2823
        %v2910 = vadd.f32 %v2674, %v2825
        %v2911 = vadd.f32 %v2675, %v2828
        %v2912 = vadd.f32 %v2676, %v2830
        %v2913 = vadd.f32 %v2677, %v2833
        %v2914 = vadd.f32 %v2678, %v2835
        %v2915 = vadd.f32 %v2679, %v2838
        %v2916 = vadd.f32 %v2680, %v2840
        %v2917 = vadd.f32 %v2681, %v2843
        %v2918 = vadd.f32 %v2682, %v2845
        %v2919 = vadd.f32 %v2683, %v2848
        %v2920 = vadd.f32 %v2684, %v2850
        %v2921 = vadd.f32 %v2685, %v2853
        %v2922 = vadd.f32 %v2686, %v2855
        %v2923 = vadd.f32 %v2687, %v2858
        %v2924 = vadd.f32 %v2688, %v2860
        %v2925 = vadd.f32 %v2689, %v2863
        %v2926 = vadd.f32 %v2690, %v2865
        %v2927 = vadd.f32 %v2691, %v2868
        %v2928 = vadd.f32 %v2692, %v2870
        %v2929 = vadd.f32 %v2693, %v2873
        %v2930 = vadd.f32 %v2694, %v2875
        %v2931 = vadd.f32 %v2695, %v2878
        %v2932 = vadd.f32 %v2696, %v2880
        %v2933 = vadd.f32 %v2697, %v2883
        %v2934 = vadd.f32 %v2698, %v2885
        %v2935 = vadd.f32 %v2699, %v2888
        %v2936 = vadd.f32 %v2700, %v2890
        %v2937 = vadd.f32 %v2701, %v2893
        %v2938 = vadd.f32 %v2702, %v2895
        %v2939 = vadd.f32 %v2703, %v2898
        %v2940 = vadd.f32 %v2704, %v2900
        %v2941 = vadd.f32 %v2705, %v2903
        %v2942 = vadd.f32 %v2706, %v2905
        %v2943 = vld [vmem:[%s2] sm:$0x1]
        %v2945 = vperm.slane %v2943, 0
        %v2947 = vmul.f32 %v2907, %v2945
        %v2948 = vmul.f32 %v2908, %v2945
        %v2949 = vmul.f32 %v2909, %v2945
        %v2950 = vmul.f32 %v2910, %v2945
        %v2951 = vmul.f32 %v2911, %v2945
        %v2952 = vmul.f32 %v2912, %v2945
        %v2953 = vmul.f32 %v2913, %v2945
        %v2954 = vmul.f32 %v2914, %v2945
        %v2955 = vmul.f32 %v2915, %v2945
        %v2956 = vmul.f32 %v2916, %v2945
        %v2957 = vmul.f32 %v2917, %v2945
        %v2958 = vmul.f32 %v2918, %v2945
        %v2959 = vmul.f32 %v2919, %v2945
        %v2960 = vmul.f32 %v2920, %v2945
        %v2961 = vmul.f32 %v2921, %v2945
        %v2962 = vmul.f32 %v2922, %v2945
        %v2963 = vmul.f32 %v2923, %v2945
        %v2964 = vmul.f32 %v2924, %v2945
        %v2965 = vmul.f32 %v2925, %v2945
        %v2966 = vmul.f32 %v2926, %v2945
        %v2967 = vmul.f32 %v2927, %v2945
        %v2968 = vmul.f32 %v2928, %v2945
        %v2969 = vmul.f32 %v2929, %v2945
        %v2970 = vmul.f32 %v2930, %v2945
        %v2971 = vmul.f32 %v2931, %v2945
        %v2972 = vmul.f32 %v2932, %v2945
        %v2973 = vmul.f32 %v2933, %v2945
        %v2974 = vmul.f32 %v2934, %v2945
        %v2975 = vmul.f32 %v2935, %v2945
        %v2976 = vmul.f32 %v2936, %v2945
        %v2977 = vmul.f32 %v2937, %v2945
        %v2978 = vmul.f32 %v2938, %v2945
        %v2979 = vmul.f32 %v2939, %v2945
        %v2980 = vmul.f32 %v2940, %v2945
        %v2981 = vmul.f32 %v2941, %v2945
        %v2982 = vmul.f32 %v2942, %v2945
        %v2983 = vld [vmem:[%s3] sm:$0x1]
        %v2985 = vperm.slane %v2983, 0
        %v2987 = vadd.f32 %v2947, %v2985
        %v2988 = vadd.f32 %v2948, %v2985
        %v2989 = vadd.f32 %v2949, %v2985
        %v2990 = vadd.f32 %v2950, %v2985
        %v2991 = vadd.f32 %v2951, %v2985
        %v2992 = vadd.f32 %v2952, %v2985
        %v2993 = vadd.f32 %v2953, %v2985
        %v2994 = vadd.f32 %v2954, %v2985
        %v2995 = vadd.f32 %v2955, %v2985
        %v2996 = vadd.f32 %v2956, %v2985
        %v2997 = vadd.f32 %v2957, %v2985
        %v2998 = vadd.f32 %v2958, %v2985
        %v2999 = vadd.f32 %v2959, %v2985
        %v3000 = vadd.f32 %v2960, %v2985
        %v3001 = vadd.f32 %v2961, %v2985
        %v3002 = vadd.f32 %v2962, %v2985
        %v3003 = vadd.f32 %v2963, %v2985
        %v3004 = vadd.f32 %v2964, %v2985
        %v3005 = vadd.f32 %v2965, %v2985
        %v3006 = vadd.f32 %v2966, %v2985
        %v3007 = vadd.f32 %v2967, %v2985
        %v3008 = vadd.f32 %v2968, %v2985
        %v3009 = vadd.f32 %v2969, %v2985
        %v3010 = vadd.f32 %v2970, %v2985
        %v3011 = vadd.f32 %v2971, %v2985
        %v3012 = vadd.f32 %v2972, %v2985
        %v3013 = vadd.f32 %v2973, %v2985
        %v3014 = vadd.f32 %v2974, %v2985
        %v3015 = vadd.f32 %v2975, %v2985
        %v3016 = vadd.f32 %v2976, %v2985
        %v3017 = vadd.f32 %v2977, %v2985
        %v3018 = vadd.f32 %v2978, %v2985
        %v3019 = vadd.f32 %v2979, %v2985
        %v3020 = vadd.f32 %v2980, %v2985
        %v3021 = vadd.f32 %v2981, %v2985
        %v3022 = vadd.f32 %v2982, %v2985
        %v3023 = vmax.f32 %v2987, 0.0
        %v3024 = vmax.f32 %v2988, 0.0
        %v3025 = vmax.f32 %v2989, 0.0
        %v3026 = vmax.f32 %v2990, 0.0
        %v3027 = vmax.f32 %v2991, 0.0
        %v3028 = vmax.f32 %v2992, 0.0
        %v3029 = vmax.f32 %v2993, 0.0
        %v3030 = vmax.f32 %v2994, 0.0
        %v3031 = vmax.f32 %v2995, 0.0
        %v3032 = vmax.f32 %v2996, 0.0
        %v3033 = vmax.f32 %v2997, 0.0
        %v3034 = vmax.f32 %v2998, 0.0
        %v3035 = vmax.f32 %v2999, 0.0
        %v3036 = vmax.f32 %v3000, 0.0
        %v3037 = vmax.f32 %v3001, 0.0
        %v3038 = vmax.f32 %v3002, 0.0
        %v3039 = vmax.f32 %v3003, 0.0
        %v3040 = vmax.f32 %v3004, 0.0
        %v3041 = vmax.f32 %v3005, 0.0
        %v3042 = vmax.f32 %v3006, 0.0
        %v3043 = vmax.f32 %v3007, 0.0
        %v3044 = vmax.f32 %v3008, 0.0
        %v3045 = vmax.f32 %v3009, 0.0
        %v3046 = vmax.f32 %v3010, 0.0
        %v3047 = vmax.f32 %v3011, 0.0
        %v3048 = vmax.f32 %v3012, 0.0
        %v3049 = vmax.f32 %v3013, 0.0
        %v3050 = vmax.f32 %v3014, 0.0
        %v3051 = vmax.f32 %v3015, 0.0
        %v3052 = vmax.f32 %v3016, 0.0
        %v3053 = vmax.f32 %v3017, 0.0
        %v3054 = vmax.f32 %v3018, 0.0
        %v3055 = vmax.f32 %v3019, 0.0
        %v3056 = vmax.f32 %v3020, 0.0
        %v3057 = vmax.f32 %v3021, 0.0
        %v3058 = vmax.f32 %v3022, 0.0
        %v3059 = vpack.c.bf16 %v3023, %v3023
        %v3060 = vpack.c.bf16 %v3024, %v3024
        %v3061 = vpack.c.bf16 %v3025, %v3025
        %v3062 = vpack.c.bf16 %v3026, %v3026
        %v3063 = vpack.c.bf16 %v3027, %v3027
        %v3064 = vpack.c.bf16 %v3028, %v3028
        %v3065 = vpack.c.bf16 %v3029, %v3029
        %v3066 = vpack.c.bf16 %v3030, %v3030
        %v3067 = vpack.c.bf16 %v3031, %v3031
        %v3068 = vpack.c.bf16 %v3032, %v3032
        %v3069 = vpack.c.bf16 %v3033, %v3033
        %v3070 = vpack.c.bf16 %v3034, %v3034
        %v3071 = vpack.c.bf16 %v3035, %v3035
        %v3072 = vpack.c.bf16 %v3036, %v3036
        %v3073 = vpack.c.bf16 %v3037, %v3037
        %v3074 = vpack.c.bf16 %v3038, %v3038
        %v3075 = vpack.c.bf16 %v3039, %v3039
        %v3076 = vpack.c.bf16 %v3040, %v3040
        %v3077 = vpack.c.bf16 %v3041, %v3041
        %v3078 = vpack.c.bf16 %v3042, %v3042
        %v3079 = vpack.c.bf16 %v3043, %v3043
        %v3080 = vpack.c.bf16 %v3044, %v3044
        %v3081 = vpack.c.bf16 %v3045, %v3045
        %v3082 = vpack.c.bf16 %v3046, %v3046
        %v3083 = vpack.c.bf16 %v3047, %v3047
        %v3084 = vpack.c.bf16 %v3048, %v3048
        %v3085 = vpack.c.bf16 %v3049, %v3049
        %v3086 = vpack.c.bf16 %v3050, %v3050
        %v3087 = vpack.c.bf16 %v3051, %v3051
        %v3088 = vpack.c.bf16 %v3052, %v3052
        %v3089 = vpack.c.bf16 %v3053, %v3053
        %v3090 = vpack.c.bf16 %v3054, %v3054
        %v3091 = vpack.c.bf16 %v3055, %v3055
        %v3092 = vpack.c.bf16 %v3056, %v3056
        %v3093 = vpack.c.bf16 %v3057, %v3057
        %v3094 = vpack.c.bf16 %v3058, %v3058
        %3095 = vst [vmem:[%s190] sm:$0xf] %v3059
        %3096 = vst [vmem:[%s190 + $0x4] sm:$0xf] %v3060
        %3097 = vst [vmem:[%s190 + $0x8] sm:$0xf] %v3061
        %3098 = vst [vmem:[%s190 + $0xc] sm:$0xf] %v3062
        %3099 = vst [vmem:[%s190 + $0x10] sm:$0xf] %v3063
        %3100 = vst [vmem:[%s190 + $0x14] sm:$0xf] %v3064
        %3101 = vst [vmem:[%s190 + $0x18] sm:$0xf] %v3065
        %3102 = vst [vmem:[%s190 + $0x1c] sm:$0xf] %v3066
        %3103 = vst [vmem:[%s190 + $0x20] sm:$0xf] %v3067
        %3104 = vst [vmem:[%s190 + $0x24] sm:$0xf] %v3068
        %3105 = vst [vmem:[%s190 + $0x28] sm:$0xf] %v3069
        %3106 = vst [vmem:[%s190 + $0x2c] sm:$0xf] %v3070
        %3107 = vst [vmem:[%s190 + $0x30] sm:$0xf] %v3071
        %3108 = vst [vmem:[%s190 + $0x34] sm:$0xf] %v3072
        %3109 = vst [vmem:[%s190 + $0x38] sm:$0xf] %v3073
        %3110 = vst [vmem:[%s190 + $0x3c] sm:$0xf] %v3074
        %3111 = vst [vmem:[%s190 + $0x40] sm:$0xf] %v3075
        %3112 = vst [vmem:[%s190 + $0x44] sm:$0xf] %v3076
        %3113 = vst [vmem:[%s190 + $0x48] sm:$0xf] %v3077
        %3114 = vst [vmem:[%s190 + $0x4c] sm:$0xf] %v3078
        %3115 = vst [vmem:[%s190 + $0x50] sm:$0xf] %v3079
        %3116 = vst [vmem:[%s190 + $0x54] sm:$0xf] %v3080
        %3117 = vst [vmem:[%s190 + $0x58] sm:$0xf] %v3081
        %3118 = vst [vmem:[%s190 + $0x5c] sm:$0xf] %v3082
        %3119 = vst [vmem:[%s190 + $0x60] sm:$0xf] %v3083
        %3120 = vst [vmem:[%s190 + $0x64] sm:$0xf] %v3084
        %3121 = vst [vmem:[%s190 + $0x68] sm:$0xf] %v3085
        %3122 = vst [vmem:[%s190 + $0x6c] sm:$0xf] %v3086
        %3123 = vst [vmem:[%s190 + $0x70] sm:$0xf] %v3087
        %3124 = vst [vmem:[%s190 + $0x74] sm:$0xf] %v3088
        %3125 = vst [vmem:[%s190 + $0x78] sm:$0xf] %v3089
        %3126 = vst [vmem:[%s190 + $0x7c] sm:$0xf] %v3090
        %3127 = vst [vmem:[%s190 + $0x80] sm:$0xf] %v3091
        %3128 = vst [vmem:[%s190 + $0x84] sm:$0xf] %v3092
        %3129 = vst [vmem:[%s190 + $0x88] sm:$0xf] %v3093
        %3130 = vst [vmem:[%s190 + $0x8c] sm:$0xf] %v3094
        %s3131 = sand.u32 %s115, 1
        %s3132 = scalar_lea.sflag [#allocation3], %s3131
        %s3133 = sand.u32 %s115, 1
        %s3134 = smul.addr %s3133, 144
        %s3135 = scalar_lea.vmem [#allocation2], %s3134
        // Predicated region
        $region37: #{tpu_custom_call.1} parent=35 // pred_check
          %p3136 = pneg %p125
        $region38: #{tpu_custom_call.1} parent=35 // pred_check_branch
          %3138 = sbr.rel (%p3136) target = $region40
        $region39: #{tpu_custom_call.1} parent=35 // pred_region
          %3140 = vsyncadd %s3132, 0
          %s3141 = smul.addr %s18, 36
          %s3142 = smul.addr %s3141, 4
          %s3143 = scalar_lea.hbm %s4, %s3142
          %s3144 = sshll.u32 %s3135, 4
          %s3145 = int_to_ptr.vmem [resolvable:$true] %s3144
          %s3146 = sshll.u32 %s3143, 4
          %s3147 = int_to_ptr.hbm [resolvable:$true] %s3146
          %3152 = dma.vmem_to_hbm [thread:$0]  %s3145, 2304, %s3147, %s3132, 64, 64, 4
        $region40: #{tpu_custom_call.1} parent=35 // pred_fallthru
          _
      $region36: #{tpu_custom_call.1} parent=5 // pred_fallthru
        _
      %p3153 = scmp.le.s32.totalorder 2, %s13
      // Predicated region
      $region41: #{tpu_custom_call.1} parent=5 // pred_check
        %p3154 = pneg %p3153
      $region42: #{tpu_custom_call.1} parent=5 // pred_check_branch
        %3156 = sbr.rel (%p3154) target = $region44
      $region43: #{tpu_custom_call.1} parent=5 // pred_region
        %s3157 = ssub.s32 %s13, 2
        // Predicated region
        $region45: #{tpu_custom_call.1} parent=43 // pred_check
          %p3158 = pneg %p131
        $region46: #{tpu_custom_call.1} parent=43 // pred_check_branch
          %3160 = sbr.rel (%p3158) target = $region48
        $region47: #{tpu_custom_call.1} parent=43 // pred_region
          %s3161 = sand.u32 %s116, 1
          %s3162 = scalar_lea.sflag [#allocation3], %s3161
          %s3163 = sand.u32 %s116, 1
          %s3164 = smul.addr %s3163, 144
          %s3165 = scalar_lea.vmem [#allocation2], %s3164
          %3167 = dma.done %s3162, 2304
        $region48: #{tpu_custom_call.1} parent=43 // pred_fallthru
          _
      $region44: #{tpu_custom_call.1} parent=5 // pred_fallthru
        _
    $region6: #{tpu_custom_call.1} parent=1 // loop_footer
      %s17 = sadd.s32 1, %s13
    $region7: #{tpu_custom_call.1} parent=1 // loop_footer_branch
      %12 = sbr.rel target = $region3
    $region8: #{tpu_custom_call.1} parent=1 // loop_exit
      _
    %3168 = vsyncpa [#allocation3], 1
    %s3169 = scalar_lea.sflag [#allocation3], 1
    %3170 = vsyncpa %s3169, 1

</llo_original>
